<compile_context>
chip_gen: v5e
topology: v5e:2x2
jax: 0.10.0
libtpu: 0.0.40
codegen_flags: <defaults>
</compile_context>

<pallas_src>
import math

import jax
import jax.numpy as jnp
from jax.experimental import pallas as pl
from jax.experimental.pallas import tpu as pltpu

NNODE = 64              # self.nNode
HIDDEN = 64             # self.hidden_dim
H2 = 2 * HIDDEN         # fused (actor|critic) hidden width = 128 -> one lane
G = 8 * HIDDEN          # fused gate width = 512 (4 gates x 128)  -> lane dense
BLK = 8                 # recurrence block size (matches (8,128) sublane tile)

# Fused gate column order: [i | f | o | g] (sigmoid gates contiguous).
# Value is the PyTorch gate index (torch order is i,f,g,o).
_GATE_ORDER = (0, 1, 3, 2)


# ----------------------------- Pallas kernel --------------------------------
def _rnn_policy_kernel(x_ref, w_in_ref, b_in_ref, w_ih_hbm, b_g_hbm, w_hh_hbm,
                       h0c0_ref, y_ref, hcT_ref,
                       w_ih_ref, b_g_ref, w_hh_ref, z_ref, sem):
    """Fused actor+critic (Linear+Tanh -> LSTM) over a length-T sequence.

    Layouts (actor block first, critic block second):
      proj / h / c : [., 128] = [actor 64 | critic 64]
      gates        : [., 512] = [i_a i_c | f_a f_c | o_a o_c | g_a g_c]
    """
    T = y_ref.shape[0]

    # Kick off the LSTM-weight DMAs so they overlap the layer-1 matmul.
    cp_ih = pltpu.make_async_copy(w_ih_hbm, w_ih_ref, sem.at[0])
    cp_bg = pltpu.make_async_copy(b_g_hbm, b_g_ref, sem.at[1])
    cp_hh = pltpu.make_async_copy(w_hh_hbm, w_hh_ref, sem.at[2])
    cp_ih.start()
    cp_bg.start()
    cp_hh.start()

    # Layer 1 (both branches, all timesteps) -- one MXU pass.
    proj = jnp.tanh(
        jnp.dot(x_ref[...], w_in_ref[...], preferred_element_type=jnp.float32)
        + b_in_ref[...])                                            # [T, 128]

    # Input->gates for the whole sequence -- one MXU pass, both biases folded.
    cp_ih.wait()
    cp_bg.wait()
    z_ref[...] = (
        jnp.dot(proj, w_ih_ref[...], preferred_element_type=jnp.float32)
        + b_g_ref[...])                                             # [T, 512]

    cp_hh.wait()
    w_hh = w_hh_ref[...]                                            # [128, 512]

    h0 = h0c0_ref[0:1, :]
    c0 = h0c0_ref[1:2, :]

    def lstm_cell(z_row, h, c):
        gates = z_row + jnp.dot(h, w_hh,
                                preferred_element_type=jnp.float32)  # [1, 512]
        sig = jax.nn.sigmoid(gates[:, :3 * H2])
        i = sig[:, 0 * H2:1 * H2]
        f = sig[:, 1 * H2:2 * H2]
        o = sig[:, 2 * H2:3 * H2]
        g = jnp.tanh(gates[:, 3 * H2:])
        c_new = f * c + i * g
        h_new = o * jnp.tanh(c_new)
        return h_new, c_new

    n_full = T // BLK
    rem = T - n_full * BLK

    def block_step(b, carry):
        h, c = carry
        t0 = pl.multiple_of(b * BLK, BLK)
        zb = z_ref[pl.ds(t0, BLK), :]            # one [8, 512] load
        rows = []
        for r in range(BLK):                     # static unroll = 8
            h, c = lstm_cell(zb[r:r + 1, :], h, c)
            rows.append(h)
        y_ref[pl.ds(t0, BLK), :] = jnp.concatenate(rows, axis=0)  # one [8,128] store
        return h, c

    if n_full > 0:
        hT, cT = jax.lax.fori_loop(0, n_full, block_step, (h0, c0))
    else:
        hT, cT = h0, c0

    if rem > 0:                                  # static remainder (< 8 steps)
        t0 = n_full * BLK
        ztail = z_ref[pl.ds(t0, rem), :]
        rows = []
        for r in range(rem):
            hT, cT = lstm_cell(ztail[r:r + 1, :], hT, cT)
            rows.append(hT)
        y_ref[pl.ds(t0, rem), :] = jnp.concatenate(rows, axis=0)

    hcT_ref[...] = jnp.concatenate([hT, cT], axis=0)


def _fused_rnn_call(x, fused, h0c0):
    T, d_in = x.shape
    vmem = pl.BlockSpec(memory_space=pltpu.MemorySpace.VMEM)
    hbm = pl.BlockSpec(memory_space=pl.ANY)
    flops = 2 * T * d_in * H2 + 2 * T * H2 * G + 2 * T * H2 * G
    transcendentals = T * 6 * H2
    # HBM traffic only (VMEM scratch excluded).
    bytes_accessed = 4 * (x.size + fused["w_in"].size + fused["b_in"].size
                          + fused["w_ih"].size + fused["b_g"].size
                          + fused["w_hh"].size + h0c0.size
                          + T * H2 + 2 * H2)
    return pl.pallas_call(
        _rnn_policy_kernel,
        out_shape=(jax.ShapeDtypeStruct((T, H2), jnp.float32),   # lstm outputs
                   jax.ShapeDtypeStruct((2, H2), jnp.float32)),  # final (h, c)
        in_specs=[vmem, vmem, vmem, hbm, hbm, hbm, vmem],
        out_specs=(vmem, vmem),
        scratch_shapes=[pltpu.VMEM((H2, G), jnp.float32),   # w_ih landing buf
                        pltpu.VMEM((1, G), jnp.float32),    # b_g landing buf
                        pltpu.VMEM((H2, G), jnp.float32),   # w_hh landing buf
                        pltpu.VMEM((T, G), jnp.float32),    # z precompute
                        pltpu.SemaphoreType.DMA((3,))],
        cost_estimate=pl.CostEstimate(flops=flops,
                                      transcendentals=transcendentals,
                                      bytes_accessed=bytes_accessed),
    )(x, fused["w_in"], fused["b_in"], fused["w_ih"], fused["b_g"],
      fused["w_hh"], h0c0)


# --------------------------- parameter creation ------------------------------
def _init_linear(key, d_in, d_out):
    # weights_init_mlp: N(0,1) rows, row-normalized; zero bias.
    w = jax.random.normal(key, (d_out, d_in), dtype=jnp.float32)
    w = w / jnp.sqrt(jnp.sum(w * w, axis=1, keepdims=True))
    return w.T, jnp.zeros((d_out,), jnp.float32)         # [d_in, d_out], [d_out]


def _init_lstm(key, d_in, h):
    # PyTorch nn.LSTM default init: U(-1/sqrt(h), 1/sqrt(h)) for all params.
    # (weights_init_mlp only touches nn.Linear, so LSTM keeps its default.)
    k1, k2, k3, k4 = jax.random.split(key, 4)
    s = 1.0 / math.sqrt(h)
    w_ih = jax.random.uniform(k1, (4 * h, d_in), jnp.float32, -s, s).T  # [d_in,4h]
    w_hh = jax.random.uniform(k2, (4 * h, h), jnp.float32, -s, s).T     # [h,4h]
    b_ih = jax.random.uniform(k3, (4 * h,), jnp.float32, -s, s)
    b_hh = jax.random.uniform(k4, (4 * h,), jnp.float32, -s, s)
    return {"w_ih": w_ih, "w_hh": w_hh, "b_ih": b_ih, "b_hh": b_hh}


def _interleave_gate_mats(wa, wc, h):
    """[da,4h],[dc,4h] (torch gate order i,f,g,o) -> block-diag [da+dc, 8h]
    with columns [i_a,i_c,f_a,f_c,o_a,o_c,g_a,g_c] (sigmoid gates first)."""
    da, dc = wa.shape[0], wc.shape[0]
    out = jnp.zeros((da + dc, 8 * h), jnp.float32)
    for slot, tg in enumerate(_GATE_ORDER):
        out = out.at[:da, (2 * slot) * h:(2 * slot + 1) * h].set(
            wa[:, tg * h:(tg + 1) * h])
        out = out.at[da:, (2 * slot + 1) * h:(2 * slot + 2) * h].set(
            wc[:, tg * h:(tg + 1) * h])
    return out


def _interleave_gate_vecs(ba, bc, h):
    parts = []
    for tg in _GATE_ORDER:
        parts.append(ba[tg * h:(tg + 1) * h])
        parts.append(bc[tg * h:(tg + 1) * h])
    return jnp.concatenate(parts)


def make_rnn_policy_params(key, num_inputs):
    """RNNPolicy params.  forward() feeds the same `inputs` to both branches,
    so num_actor_inputs == num_critic_inputs == num_inputs."""
    ka_lin, ka_lstm, kc_lin, kc_lstm = jax.random.split(key, 4)

    aw, ab = _init_linear(ka_lin, num_inputs, NNODE)
    cw, cb = _init_linear(kc_lin, num_inputs, NNODE)
    a_lstm = _init_lstm(ka_lstm, NNODE, HIDDEN)
    c_lstm = _init_lstm(kc_lstm, NNODE, HIDDEN)

    fused = {
        "w_in": jnp.concatenate([aw, cw], axis=1),                     # [D_in,128]
        "b_in": jnp.concatenate([ab, cb]).reshape(1, H2),              # [1,128]
        "w_ih": _interleave_gate_mats(a_lstm["w_ih"], c_lstm["w_ih"], HIDDEN),
        "w_hh": _interleave_gate_mats(a_lstm["w_hh"], c_lstm["w_hh"], HIDDEN),
        "b_g": _interleave_gate_vecs(a_lstm["b_ih"] + a_lstm["b_hh"],
                                     c_lstm["b_ih"] + c_lstm["b_hh"],
                                     HIDDEN).reshape(1, G),            # [1,512]
    }
    raw = {"actor": {"w_in": aw, "b_in": ab, **a_lstm},
           "critic": {"w_in": cw, "b_in": cb, **c_lstm}}
    # TODO(synk): critic_linear and self.dist are defined in __init__ but not
    # used by forward(); omitted here.
    return {"fused": fused, "raw": raw}


# ------------------------------- forward -------------------------------------
def rnn_policy_forward(params, inputs, states, masks, lstm_state=None):
    """Mirrors RNNPolicy.forward.

    Returns ([hidden_critic], [hidden_actor], states, new_lstm_state).
    The 4th element is the functional replacement for the torch module's
    stateful self.a_lstm_hidden / self.c_lstm_hidden:
      row 0 = [h_actor | h_critic], row 1 = [c_actor | c_critic]  (shape [2,128])
    masks are unused, exactly like the reference module.
    """
    T = inputs.shape[0]
    x = inputs.reshape(T, -1).astype(jnp.float32)
    if lstm_state is None:
        lstm_state = jnp.zeros((2, H2), jnp.float32)   # init_hidden(): zeros
    y, hcT = _fused_rnn_call(x, params["fused"], lstm_state)
    hidden_actor = y[:, :HIDDEN]
    hidden_critic = y[:, HIDDEN:]
    return [hidden_critic], [hidden_actor], states, hcT


# ------------------------- plain-JAX reference --------------------------------
def _ref_branch(x, p, h):
    proj = jnp.tanh(x @ p["w_in"] + p["b_in"])           # [T, 64]
    z = proj @ p["w_ih"] + p["b_ih"] + p["b_hh"]         # [T, 256]

    def step(carry, z_t):
        hh, cc = carry
        gates = z_t + hh @ p["w_hh"]
        i = jax.nn.sigmoid(gates[0:h])
        f = jax.nn.sigmoid(gates[h:2 * h])
        g = jnp.tanh(gates[2 * h:3 * h])
        o = jax.nn.sigmoid(gates[3 * h:4 * h])
        cc = f * cc + i * g
        hh = o * jnp.tanh(cc)
        return (hh, cc), hh

    (hT, cT), ys = jax.lax.scan(step, (jnp.zeros(h), jnp.zeros(h)), z)
    return ys, hT, cT


# -------------------------------- main ----------------------------------------
if __name__ == "__main__":
    key = jax.random.PRNGKey(0)
    k_param, k_in = jax.random.split(key)

    T = 12                 # sequence length (exercises both block + tail paths)
    num_inputs = 32        # num_actor_inputs == num_critic_inputs
    inputs = jax.random.normal(k_in, (T, num_inputs), dtype=jnp.float32)
    states = jnp.zeros((T, 1), dtype=jnp.float32)   # state_size == 1
    masks = jnp.ones((T, 1), dtype=jnp.float32)

    params = make_rnn_policy_params(k_param, num_inputs)

    hidden_critic_l, hidden_actor_l, out_states, new_hc = rnn_policy_forward(
        params, inputs, states, masks)
    jax.block_until_ready((hidden_critic_l, hidden_actor_l, out_states, new_hc))

    # Cross-check against a plain-JAX reference of the unfused math
    # (non-zero LSTM biases exercise the bias broadcast paths).
    ya, hTa, cTa = _ref_branch(inputs, params["raw"]["actor"], HIDDEN)
    yc, hTc, cTc = _ref_branch(inputs, params["raw"]["critic"], HIDDEN)

    assert hidden_actor_l[0].shape == (T, HIDDEN)
    assert hidden_critic_l[0].shape == (T, HIDDEN)
    assert jnp.allclose(hidden_actor_l[0], ya, atol=5e-4, rtol=5e-4)
    assert jnp.allclose(hidden_critic_l[0], yc, atol=5e-4, rtol=5e-4)
    assert jnp.allclose(new_hc[0, :HIDDEN], hTa, atol=5e-4, rtol=5e-4)
    assert jnp.allclose(new_hc[0, HIDDEN:], hTc, atol=5e-4, rtol=5e-4)
    assert jnp.allclose(new_hc[1, :HIDDEN], cTa, atol=5e-4, rtol=5e-4)
    assert jnp.allclose(new_hc[1, HIDDEN:], cTc, atol=5e-4, rtol=5e-4)
    assert jnp.allclose(out_states, states)

    print("KERNEL_OK")
</pallas_src>

<mosaic_0001>
module attributes {stable_mosaic.version = 11 : i64} {
  func.func @_rnn_policy_kernel(%arg0: memref<12x32xf32, #tpu.memory_space<vmem>>, %arg1: memref<32x128xf32, #tpu.memory_space<vmem>>, %arg2: memref<1x128xf32, #tpu.memory_space<vmem>>, %arg3: memref<128x512xf32, #tpu.memory_space<any>>, %arg4: memref<1x512xf32, #tpu.memory_space<any>>, %arg5: memref<128x512xf32, #tpu.memory_space<any>>, %arg6: memref<2x128xf32, #tpu.memory_space<vmem>>, %arg7: memref<12x128xf32, #tpu.memory_space<vmem>>, %arg8: memref<2x128xf32, #tpu.memory_space<vmem>>, %arg9: memref<128x512xf32, #tpu.memory_space<vmem>>, %arg10: memref<1x512xf32, #tpu.memory_space<vmem>>, %arg11: memref<128x512xf32, #tpu.memory_space<vmem>>, %arg12: memref<12x512xf32, #tpu.memory_space<vmem>>, %arg13: memref<3x!tpu.dma_semaphore, #tpu.memory_space<semaphore_mem>>) attributes {dimension_semantics = [], scalar_prefetch = 0 : i64, scratch_operands = 5 : i64, tpu.core_type = #tpu.core_type<tc>} {
    %c0_i32 = arith.constant 0 : i32
    %0 = tpu.memref_slice %arg13[%c0_i32] : memref<3x!tpu.dma_semaphore, #tpu.memory_space<semaphore_mem>> -> memref<1x!tpu.dma_semaphore, #tpu.memory_space<semaphore_mem>>
    %1 = tpu.memref_squeeze %0 : memref<1x!tpu.dma_semaphore, #tpu.memory_space<semaphore_mem>> -> memref<!tpu.dma_semaphore, #tpu.memory_space<semaphore_mem>>
    tpu.enqueue_dma source(%arg3 : memref<128x512xf32, #tpu.memory_space<any>>) target(%arg9 : memref<128x512xf32, #tpu.memory_space<vmem>>) target_semaphore(%1 : memref<!tpu.dma_semaphore, #tpu.memory_space<semaphore_mem>>)
    %c1_i32 = arith.constant 1 : i32
    %2 = tpu.memref_slice %arg13[%c1_i32] : memref<3x!tpu.dma_semaphore, #tpu.memory_space<semaphore_mem>> -> memref<1x!tpu.dma_semaphore, #tpu.memory_space<semaphore_mem>>
    %3 = tpu.memref_squeeze %2 : memref<1x!tpu.dma_semaphore, #tpu.memory_space<semaphore_mem>> -> memref<!tpu.dma_semaphore, #tpu.memory_space<semaphore_mem>>
    tpu.enqueue_dma source(%arg4 : memref<1x512xf32, #tpu.memory_space<any>>) target(%arg10 : memref<1x512xf32, #tpu.memory_space<vmem>>) target_semaphore(%3 : memref<!tpu.dma_semaphore, #tpu.memory_space<semaphore_mem>>)
    %c2_i32 = arith.constant 2 : i32
    %4 = tpu.memref_slice %arg13[%c2_i32] : memref<3x!tpu.dma_semaphore, #tpu.memory_space<semaphore_mem>> -> memref<1x!tpu.dma_semaphore, #tpu.memory_space<semaphore_mem>>
    %5 = tpu.memref_squeeze %4 : memref<1x!tpu.dma_semaphore, #tpu.memory_space<semaphore_mem>> -> memref<!tpu.dma_semaphore, #tpu.memory_space<semaphore_mem>>
    tpu.enqueue_dma source(%arg5 : memref<128x512xf32, #tpu.memory_space<any>>) target(%arg11 : memref<128x512xf32, #tpu.memory_space<vmem>>) target_semaphore(%5 : memref<!tpu.dma_semaphore, #tpu.memory_space<semaphore_mem>>)
    %c0 = arith.constant 0 : index
    %c0_0 = arith.constant 0 : index
    %6 = vector.load %arg0[%c0, %c0_0] : memref<12x32xf32, #tpu.memory_space<vmem>>, vector<12x32xf32>
    %c0_1 = arith.constant 0 : index
    %c0_2 = arith.constant 0 : index
    %7 = vector.load %arg1[%c0_1, %c0_2] : memref<32x128xf32, #tpu.memory_space<vmem>>, vector<32x128xf32>
    %cst = arith.constant dense<0.000000e+00> : vector<12x128xf32>
    %8 = tpu.matmul %6, %7, %cst {dimension_numbers = #tpu.dot_dimension_numbers<[1], [0], [0], [1], [0, 0, 1, 1], [], []>} : vector<12x32xf32>, vector<32x128xf32>, vector<12x128xf32> -> vector<12x128xf32>
    %c0_3 = arith.constant 0 : index
    %c0_4 = arith.constant 0 : index
    %9 = vector.load %arg2[%c0_3, %c0_4] : memref<1x128xf32, #tpu.memory_space<vmem>>, vector<1x128xf32>
    %10 = vector.broadcast %9 : vector<1x128xf32> to vector<12x128xf32>
    %11 = arith.addf %8, %10 : vector<12x128xf32>
    %12 = math.tanh %11 : vector<12x128xf32>
    %c0_i32_5 = arith.constant 0 : i32
    %13 = tpu.memref_slice %arg13[%c0_i32_5] : memref<3x!tpu.dma_semaphore, #tpu.memory_space<semaphore_mem>> -> memref<1x!tpu.dma_semaphore, #tpu.memory_space<semaphore_mem>>
    %14 = tpu.memref_squeeze %13 : memref<1x!tpu.dma_semaphore, #tpu.memory_space<semaphore_mem>> -> memref<!tpu.dma_semaphore, #tpu.memory_space<semaphore_mem>>
    tpu.wait_dma2 semaphore(%14 : memref<!tpu.dma_semaphore, #tpu.memory_space<semaphore_mem>>) src(%arg3 : memref<128x512xf32, #tpu.memory_space<any>>) dst(%arg9 : memref<128x512xf32, #tpu.memory_space<vmem>>)
    %c1_i32_6 = arith.constant 1 : i32
    %15 = tpu.memref_slice %arg13[%c1_i32_6] : memref<3x!tpu.dma_semaphore, #tpu.memory_space<semaphore_mem>> -> memref<1x!tpu.dma_semaphore, #tpu.memory_space<semaphore_mem>>
    %16 = tpu.memref_squeeze %15 : memref<1x!tpu.dma_semaphore, #tpu.memory_space<semaphore_mem>> -> memref<!tpu.dma_semaphore, #tpu.memory_space<semaphore_mem>>
    tpu.wait_dma2 semaphore(%16 : memref<!tpu.dma_semaphore, #tpu.memory_space<semaphore_mem>>) src(%arg4 : memref<1x512xf32, #tpu.memory_space<any>>) dst(%arg10 : memref<1x512xf32, #tpu.memory_space<vmem>>)
    %c0_7 = arith.constant 0 : index
    %c0_8 = arith.constant 0 : index
    %17 = vector.load %arg9[%c0_7, %c0_8] : memref<128x512xf32, #tpu.memory_space<vmem>>, vector<128x512xf32>
    %cst_9 = arith.constant dense<0.000000e+00> : vector<12x512xf32>
    %18 = tpu.matmul %12, %17, %cst_9 {dimension_numbers = #tpu.dot_dimension_numbers<[1], [0], [0], [1], [0, 0, 1, 1], [], []>} : vector<12x128xf32>, vector<128x512xf32>, vector<12x512xf32> -> vector<12x512xf32>
    %c0_10 = arith.constant 0 : index
    %c0_11 = arith.constant 0 : index
    %19 = vector.load %arg10[%c0_10, %c0_11] : memref<1x512xf32, #tpu.memory_space<vmem>>, vector<1x512xf32>
    %20 = vector.broadcast %19 : vector<1x512xf32> to vector<12x512xf32>
    %21 = arith.addf %18, %20 : vector<12x512xf32>
    %c0_12 = arith.constant 0 : index
    %c0_13 = arith.constant 0 : index
    %22 = vector.load %arg12[%c0_12, %c0_13] : memref<12x512xf32, #tpu.memory_space<vmem>>, vector<12x512xf32>
    tpu.vector_store %arg12[%c0_12, %c0_13], %21 {strides = array<i32>} : memref<12x512xf32, #tpu.memory_space<vmem>>, vector<12x512xf32>,
    %c2_i32_14 = arith.constant 2 : i32
    %23 = tpu.memref_slice %arg13[%c2_i32_14] : memref<3x!tpu.dma_semaphore, #tpu.memory_space<semaphore_mem>> -> memref<1x!tpu.dma_semaphore, #tpu.memory_space<semaphore_mem>>
    %24 = tpu.memref_squeeze %23 : memref<1x!tpu.dma_semaphore, #tpu.memory_space<semaphore_mem>> -> memref<!tpu.dma_semaphore, #tpu.memory_space<semaphore_mem>>
    tpu.wait_dma2 semaphore(%24 : memref<!tpu.dma_semaphore, #tpu.memory_space<semaphore_mem>>) src(%arg5 : memref<128x512xf32, #tpu.memory_space<any>>) dst(%arg11 : memref<128x512xf32, #tpu.memory_space<vmem>>)
    %c0_15 = arith.constant 0 : index
    %c0_16 = arith.constant 0 : index
    %25 = vector.load %arg11[%c0_15, %c0_16] : memref<128x512xf32, #tpu.memory_space<vmem>>, vector<128x512xf32>
    %c0_17 = arith.constant 0 : index
    %c0_18 = arith.constant 0 : index
    %26 = vector.load %arg6[%c0_17, %c0_18] : memref<2x128xf32, #tpu.memory_space<vmem>>, vector<1x128xf32>
    %c1 = arith.constant 1 : index
    %c0_19 = arith.constant 0 : index
    %27 = vector.load %arg6[%c1, %c0_19] : memref<2x128xf32, #tpu.memory_space<vmem>>, vector<1x128xf32>
    %c0_i32_20 = arith.constant 0 : i32
    %c8_i32 = arith.constant 8 : i32
    %28 = arith.muli %c0_i32_20, %c8_i32 : i32
    %29 = tpu.assume_multiple %28, 8 : i32
    %30 = arith.index_cast %29 : i32 to index
    %c0_21 = arith.constant 0 : index
    %31 = vector.load %arg12[%30, %c0_21] : memref<12x512xf32, #tpu.memory_space<vmem>>, vector<8x512xf32>
    %32 = vector.extract_strided_slice %31 {offsets = [0, 0], sizes = [1, 512], strides = [1, 1]} : vector<8x512xf32> to vector<1x512xf32>
    %cst_22 = arith.constant dense<0.000000e+00> : vector<1x512xf32>
    %33 = tpu.matmul %26, %25, %cst_22 {dimension_numbers = #tpu.dot_dimension_numbers<[1], [0], [0], [1], [0, 0, 1, 1], [], []>} : vector<1x128xf32>, vector<128x512xf32>, vector<1x512xf32> -> vector<1x512xf32>
    %34 = arith.addf %32, %33 : vector<1x512xf32>
    %35 = vector.extract_strided_slice %34 {offsets = [0, 0], sizes = [1, 384], strides = [1, 1]} : vector<1x512xf32> to vector<1x384xf32>
    %36 = arith.negf %35 : vector<1x384xf32>
    %37 = math.exp %36 : vector<1x384xf32>
    %cst_23 = arith.constant 1.000000e+00 : f32
    %38 = vector.broadcast %cst_23 : f32 to vector<1x384xf32>
    %39 = arith.addf %38, %37 : vector<1x384xf32>
    %40 = arith.divf %38, %39 : vector<1x384xf32>
    %41 = vector.extract_strided_slice %40 {offsets = [0, 0], sizes = [1, 128], strides = [1, 1]} : vector<1x384xf32> to vector<1x128xf32>
    %42 = vector.extract_strided_slice %40 {offsets = [0, 128], sizes = [1, 128], strides = [1, 1]} : vector<1x384xf32> to vector<1x128xf32>
    %43 = vector.extract_strided_slice %40 {offsets = [0, 256], sizes = [1, 128], strides = [1, 1]} : vector<1x384xf32> to vector<1x128xf32>
    %44 = vector.extract_strided_slice %34 {offsets = [0, 384], sizes = [1, 128], strides = [1, 1]} : vector<1x512xf32> to vector<1x128xf32>
    %45 = math.tanh %44 : vector<1x128xf32>
    %46 = arith.mulf %42, %27 : vector<1x128xf32>
    %47 = arith.mulf %41, %45 : vector<1x128xf32>
    %48 = arith.addf %46, %47 : vector<1x128xf32>
    %49 = math.tanh %48 : vector<1x128xf32>
    %50 = arith.mulf %43, %49 : vector<1x128xf32>
    %51 = vector.extract_strided_slice %31 {offsets = [1, 0], sizes = [1, 512], strides = [1, 1]} : vector<8x512xf32> to vector<1x512xf32>
    %cst_24 = arith.constant dense<0.000000e+00> : vector<1x512xf32>
    %52 = tpu.matmul %50, %25, %cst_24 {dimension_numbers = #tpu.dot_dimension_numbers<[1], [0], [0], [1], [0, 0, 1, 1], [], []>} : vector<1x128xf32>, vector<128x512xf32>, vector<1x512xf32> -> vector<1x512xf32>
    %53 = arith.addf %51, %52 : vector<1x512xf32>
    %54 = vector.extract_strided_slice %53 {offsets = [0, 0], sizes = [1, 384], strides = [1, 1]} : vector<1x512xf32> to vector<1x384xf32>
    %55 = arith.negf %54 : vector<1x384xf32>
    %56 = math.exp %55 : vector<1x384xf32>
    %cst_25 = arith.constant 1.000000e+00 : f32
    %57 = vector.broadcast %cst_25 : f32 to vector<1x384xf32>
    %58 = arith.addf %57, %56 : vector<1x384xf32>
    %59 = arith.divf %57, %58 : vector<1x384xf32>
    %60 = vector.extract_strided_slice %59 {offsets = [0, 0], sizes = [1, 128], strides = [1, 1]} : vector<1x384xf32> to vector<1x128xf32>
    %61 = vector.extract_strided_slice %59 {offsets = [0, 128], sizes = [1, 128], strides = [1, 1]} : vector<1x384xf32> to vector<1x128xf32>
    %62 = vector.extract_strided_slice %59 {offsets = [0, 256], sizes = [1, 128], strides = [1, 1]} : vector<1x384xf32> to vector<1x128xf32>
    %63 = vector.extract_strided_slice %53 {offsets = [0, 384], sizes = [1, 128], strides = [1, 1]} : vector<1x512xf32> to vector<1x128xf32>
    %64 = math.tanh %63 : vector<1x128xf32>
    %65 = arith.mulf %61, %48 : vector<1x128xf32>
    %66 = arith.mulf %60, %64 : vector<1x128xf32>
    %67 = arith.addf %65, %66 : vector<1x128xf32>
    %68 = math.tanh %67 : vector<1x128xf32>
    %69 = arith.mulf %62, %68 : vector<1x128xf32>
    %70 = vector.extract_strided_slice %31 {offsets = [2, 0], sizes = [1, 512], strides = [1, 1]} : vector<8x512xf32> to vector<1x512xf32>
    %cst_26 = arith.constant dense<0.000000e+00> : vector<1x512xf32>
    %71 = tpu.matmul %69, %25, %cst_26 {dimension_numbers = #tpu.dot_dimension_numbers<[1], [0], [0], [1], [0, 0, 1, 1], [], []>} : vector<1x128xf32>, vector<128x512xf32>, vector<1x512xf32> -> vector<1x512xf32>
    %72 = arith.addf %70, %71 : vector<1x512xf32>
    %73 = vector.extract_strided_slice %72 {offsets = [0, 0], sizes = [1, 384], strides = [1, 1]} : vector<1x512xf32> to vector<1x384xf32>
    %74 = arith.negf %73 : vector<1x384xf32>
    %75 = math.exp %74 : vector<1x384xf32>
    %cst_27 = arith.constant 1.000000e+00 : f32
    %76 = vector.broadcast %cst_27 : f32 to vector<1x384xf32>
    %77 = arith.addf %76, %75 : vector<1x384xf32>
    %78 = arith.divf %76, %77 : vector<1x384xf32>
    %79 = vector.extract_strided_slice %78 {offsets = [0, 0], sizes = [1, 128], strides = [1, 1]} : vector<1x384xf32> to vector<1x128xf32>
    %80 = vector.extract_strided_slice %78 {offsets = [0, 128], sizes = [1, 128], strides = [1, 1]} : vector<1x384xf32> to vector<1x128xf32>
    %81 = vector.extract_strided_slice %78 {offsets = [0, 256], sizes = [1, 128], strides = [1, 1]} : vector<1x384xf32> to vector<1x128xf32>
    %82 = vector.extract_strided_slice %72 {offsets = [0, 384], sizes = [1, 128], strides = [1, 1]} : vector<1x512xf32> to vector<1x128xf32>
    %83 = math.tanh %82 : vector<1x128xf32>
    %84 = arith.mulf %80, %67 : vector<1x128xf32>
    %85 = arith.mulf %79, %83 : vector<1x128xf32>
    %86 = arith.addf %84, %85 : vector<1x128xf32>
    %87 = math.tanh %86 : vector<1x128xf32>
    %88 = arith.mulf %81, %87 : vector<1x128xf32>
    %89 = vector.extract_strided_slice %31 {offsets = [3, 0], sizes = [1, 512], strides = [1, 1]} : vector<8x512xf32> to vector<1x512xf32>
    %cst_28 = arith.constant dense<0.000000e+00> : vector<1x512xf32>
    %90 = tpu.matmul %88, %25, %cst_28 {dimension_numbers = #tpu.dot_dimension_numbers<[1], [0], [0], [1], [0, 0, 1, 1], [], []>} : vector<1x128xf32>, vector<128x512xf32>, vector<1x512xf32> -> vector<1x512xf32>
    %91 = arith.addf %89, %90 : vector<1x512xf32>
    %92 = vector.extract_strided_slice %91 {offsets = [0, 0], sizes = [1, 384], strides = [1, 1]} : vector<1x512xf32> to vector<1x384xf32>
    %93 = arith.negf %92 : vector<1x384xf32>
    %94 = math.exp %93 : vector<1x384xf32>
    %cst_29 = arith.constant 1.000000e+00 : f32
    %95 = vector.broadcast %cst_29 : f32 to vector<1x384xf32>
    %96 = arith.addf %95, %94 : vector<1x384xf32>
    %97 = arith.divf %95, %96 : vector<1x384xf32>
    %98 = vector.extract_strided_slice %97 {offsets = [0, 0], sizes = [1, 128], strides = [1, 1]} : vector<1x384xf32> to vector<1x128xf32>
    %99 = vector.extract_strided_slice %97 {offsets = [0, 128], sizes = [1, 128], strides = [1, 1]} : vector<1x384xf32> to vector<1x128xf32>
    %100 = vector.extract_strided_slice %97 {offsets = [0, 256], sizes = [1, 128], strides = [1, 1]} : vector<1x384xf32> to vector<1x128xf32>
    %101 = vector.extract_strided_slice %91 {offsets = [0, 384], sizes = [1, 128], strides = [1, 1]} : vector<1x512xf32> to vector<1x128xf32>
    %102 = math.tanh %101 : vector<1x128xf32>
    %103 = arith.mulf %99, %86 : vector<1x128xf32>
    %104 = arith.mulf %98, %102 : vector<1x128xf32>
    %105 = arith.addf %103, %104 : vector<1x128xf32>
    %106 = math.tanh %105 : vector<1x128xf32>
    %107 = arith.mulf %100, %106 : vector<1x128xf32>
    %108 = vector.extract_strided_slice %31 {offsets = [4, 0], sizes = [1, 512], strides = [1, 1]} : vector<8x512xf32> to vector<1x512xf32>
    %cst_30 = arith.constant dense<0.000000e+00> : vector<1x512xf32>
    %109 = tpu.matmul %107, %25, %cst_30 {dimension_numbers = #tpu.dot_dimension_numbers<[1], [0], [0], [1], [0, 0, 1, 1], [], []>} : vector<1x128xf32>, vector<128x512xf32>, vector<1x512xf32> -> vector<1x512xf32>
    %110 = arith.addf %108, %109 : vector<1x512xf32>
    %111 = vector.extract_strided_slice %110 {offsets = [0, 0], sizes = [1, 384], strides = [1, 1]} : vector<1x512xf32> to vector<1x384xf32>
    %112 = arith.negf %111 : vector<1x384xf32>
    %113 = math.exp %112 : vector<1x384xf32>
    %cst_31 = arith.constant 1.000000e+00 : f32
    %114 = vector.broadcast %cst_31 : f32 to vector<1x384xf32>
    %115 = arith.addf %114, %113 : vector<1x384xf32>
    %116 = arith.divf %114, %115 : vector<1x384xf32>
    %117 = vector.extract_strided_slice %116 {offsets = [0, 0], sizes = [1, 128], strides = [1, 1]} : vector<1x384xf32> to vector<1x128xf32>
    %118 = vector.extract_strided_slice %116 {offsets = [0, 128], sizes = [1, 128], strides = [1, 1]} : vector<1x384xf32> to vector<1x128xf32>
    %119 = vector.extract_strided_slice %116 {offsets = [0, 256], sizes = [1, 128], strides = [1, 1]} : vector<1x384xf32> to vector<1x128xf32>
    %120 = vector.extract_strided_slice %110 {offsets = [0, 384], sizes = [1, 128], strides = [1, 1]} : vector<1x512xf32> to vector<1x128xf32>
    %121 = math.tanh %120 : vector<1x128xf32>
    %122 = arith.mulf %118, %105 : vector<1x128xf32>
    %123 = arith.mulf %117, %121 : vector<1x128xf32>
    %124 = arith.addf %122, %123 : vector<1x128xf32>
    %125 = math.tanh %124 : vector<1x128xf32>
    %126 = arith.mulf %119, %125 : vector<1x128xf32>
    %127 = vector.extract_strided_slice %31 {offsets = [5, 0], sizes = [1, 512], strides = [1, 1]} : vector<8x512xf32> to vector<1x512xf32>
    %cst_32 = arith.constant dense<0.000000e+00> : vector<1x512xf32>
    %128 = tpu.matmul %126, %25, %cst_32 {dimension_numbers = #tpu.dot_dimension_numbers<[1], [0], [0], [1], [0, 0, 1, 1], [], []>} : vector<1x128xf32>, vector<128x512xf32>, vector<1x512xf32> -> vector<1x512xf32>
    %129 = arith.addf %127, %128 : vector<1x512xf32>
    %130 = vector.extract_strided_slice %129 {offsets = [0, 0], sizes = [1, 384], strides = [1, 1]} : vector<1x512xf32> to vector<1x384xf32>
    %131 = arith.negf %130 : vector<1x384xf32>
    %132 = math.exp %131 : vector<1x384xf32>
    %cst_33 = arith.constant 1.000000e+00 : f32
    %133 = vector.broadcast %cst_33 : f32 to vector<1x384xf32>
    %134 = arith.addf %133, %132 : vector<1x384xf32>
    %135 = arith.divf %133, %134 : vector<1x384xf32>
    %136 = vector.extract_strided_slice %135 {offsets = [0, 0], sizes = [1, 128], strides = [1, 1]} : vector<1x384xf32> to vector<1x128xf32>
    %137 = vector.extract_strided_slice %135 {offsets = [0, 128], sizes = [1, 128], strides = [1, 1]} : vector<1x384xf32> to vector<1x128xf32>
    %138 = vector.extract_strided_slice %135 {offsets = [0, 256], sizes = [1, 128], strides = [1, 1]} : vector<1x384xf32> to vector<1x128xf32>
    %139 = vector.extract_strided_slice %129 {offsets = [0, 384], sizes = [1, 128], strides = [1, 1]} : vector<1x512xf32> to vector<1x128xf32>
    %140 = math.tanh %139 : vector<1x128xf32>
    %141 = arith.mulf %137, %124 : vector<1x128xf32>
    %142 = arith.mulf %136, %140 : vector<1x128xf32>
    %143 = arith.addf %141, %142 : vector<1x128xf32>
    %144 = math.tanh %143 : vector<1x128xf32>
    %145 = arith.mulf %138, %144 : vector<1x128xf32>
    %146 = vector.extract_strided_slice %31 {offsets = [6, 0], sizes = [1, 512], strides = [1, 1]} : vector<8x512xf32> to vector<1x512xf32>
    %cst_34 = arith.constant dense<0.000000e+00> : vector<1x512xf32>
    %147 = tpu.matmul %145, %25, %cst_34 {dimension_numbers = #tpu.dot_dimension_numbers<[1], [0], [0], [1], [0, 0, 1, 1], [], []>} : vector<1x128xf32>, vector<128x512xf32>, vector<1x512xf32> -> vector<1x512xf32>
    %148 = arith.addf %146, %147 : vector<1x512xf32>
    %149 = vector.extract_strided_slice %148 {offsets = [0, 0], sizes = [1, 384], strides = [1, 1]} : vector<1x512xf32> to vector<1x384xf32>
    %150 = arith.negf %149 : vector<1x384xf32>
    %151 = math.exp %150 : vector<1x384xf32>
    %cst_35 = arith.constant 1.000000e+00 : f32
    %152 = vector.broadcast %cst_35 : f32 to vector<1x384xf32>
    %153 = arith.addf %152, %151 : vector<1x384xf32>
    %154 = arith.divf %152, %153 : vector<1x384xf32>
    %155 = vector.extract_strided_slice %154 {offsets = [0, 0], sizes = [1, 128], strides = [1, 1]} : vector<1x384xf32> to vector<1x128xf32>
    %156 = vector.extract_strided_slice %154 {offsets = [0, 128], sizes = [1, 128], strides = [1, 1]} : vector<1x384xf32> to vector<1x128xf32>
    %157 = vector.extract_strided_slice %154 {offsets = [0, 256], sizes = [1, 128], strides = [1, 1]} : vector<1x384xf32> to vector<1x128xf32>
    %158 = vector.extract_strided_slice %148 {offsets = [0, 384], sizes = [1, 128], strides = [1, 1]} : vector<1x512xf32> to vector<1x128xf32>
    %159 = math.tanh %158 : vector<1x128xf32>
    %160 = arith.mulf %156, %143 : vector<1x128xf32>
    %161 = arith.mulf %155, %159 : vector<1x128xf32>
    %162 = arith.addf %160, %161 : vector<1x128xf32>
    %163 = math.tanh %162 : vector<1x128xf32>
    %164 = arith.mulf %157, %163 : vector<1x128xf32>
    %165 = vector.extract_strided_slice %31 {offsets = [7, 0], sizes = [1, 512], strides = [1, 1]} : vector<8x512xf32> to vector<1x512xf32>
    %cst_36 = arith.constant dense<0.000000e+00> : vector<1x512xf32>
    %166 = tpu.matmul %164, %25, %cst_36 {dimension_numbers = #tpu.dot_dimension_numbers<[1], [0], [0], [1], [0, 0, 1, 1], [], []>} : vector<1x128xf32>, vector<128x512xf32>, vector<1x512xf32> -> vector<1x512xf32>
    %167 = arith.addf %165, %166 : vector<1x512xf32>
    %168 = vector.extract_strided_slice %167 {offsets = [0, 0], sizes = [1, 384], strides = [1, 1]} : vector<1x512xf32> to vector<1x384xf32>
    %169 = arith.negf %168 : vector<1x384xf32>
    %170 = math.exp %169 : vector<1x384xf32>
    %cst_37 = arith.constant 1.000000e+00 : f32
    %171 = vector.broadcast %cst_37 : f32 to vector<1x384xf32>
    %172 = arith.addf %171, %170 : vector<1x384xf32>
    %173 = arith.divf %171, %172 : vector<1x384xf32>
    %174 = vector.extract_strided_slice %173 {offsets = [0, 0], sizes = [1, 128], strides = [1, 1]} : vector<1x384xf32> to vector<1x128xf32>
    %175 = vector.extract_strided_slice %173 {offsets = [0, 128], sizes = [1, 128], strides = [1, 1]} : vector<1x384xf32> to vector<1x128xf32>
    %176 = vector.extract_strided_slice %173 {offsets = [0, 256], sizes = [1, 128], strides = [1, 1]} : vector<1x384xf32> to vector<1x128xf32>
    %177 = vector.extract_strided_slice %167 {offsets = [0, 384], sizes = [1, 128], strides = [1, 1]} : vector<1x512xf32> to vector<1x128xf32>
    %178 = math.tanh %177 : vector<1x128xf32>
    %179 = arith.mulf %175, %162 : vector<1x128xf32>
    %180 = arith.mulf %174, %178 : vector<1x128xf32>
    %181 = arith.addf %179, %180 : vector<1x128xf32>
    %182 = math.tanh %181 : vector<1x128xf32>
    %183 = arith.mulf %176, %182 : vector<1x128xf32>
    %184 = tpu.concatenate %50, %69, %88, %107, %126, %145, %164, %183 in 0 : vector<1x128xf32>, vector<1x128xf32>, vector<1x128xf32>, vector<1x128xf32>, vector<1x128xf32>, vector<1x128xf32>, vector<1x128xf32>, vector<1x128xf32> -> vector<8x128xf32>
    %185 = arith.index_cast %29 : i32 to index
    %c0_38 = arith.constant 0 : index
    %186 = vector.load %arg7[%185, %c0_38] : memref<12x128xf32, #tpu.memory_space<vmem>>, vector<8x128xf32>
    tpu.vector_store %arg7[%185, %c0_38], %184 {strides = array<i32>} : memref<12x128xf32, #tpu.memory_space<vmem>>, vector<8x128xf32>,
    %c1_i32_39 = arith.constant 1 : i32
    %c8 = arith.constant 8 : index
    %c0_40 = arith.constant 0 : index
    %187 = vector.load %arg12[%c8, %c0_40] : memref<12x512xf32, #tpu.memory_space<vmem>>, vector<4x512xf32>
    %188 = vector.extract_strided_slice %187 {offsets = [0, 0], sizes = [1, 512], strides = [1, 1]} : vector<4x512xf32> to vector<1x512xf32>
    %cst_41 = arith.constant dense<0.000000e+00> : vector<1x512xf32>
    %189 = tpu.matmul %183, %25, %cst_41 {dimension_numbers = #tpu.dot_dimension_numbers<[1], [0], [0], [1], [0, 0, 1, 1], [], []>} : vector<1x128xf32>, vector<128x512xf32>, vector<1x512xf32> -> vector<1x512xf32>
    %190 = arith.addf %188, %189 : vector<1x512xf32>
    %191 = vector.extract_strided_slice %190 {offsets = [0, 0], sizes = [1, 384], strides = [1, 1]} : vector<1x512xf32> to vector<1x384xf32>
    %192 = arith.negf %191 : vector<1x384xf32>
    %193 = math.exp %192 : vector<1x384xf32>
    %cst_42 = arith.constant 1.000000e+00 : f32
    %194 = vector.broadcast %cst_42 : f32 to vector<1x384xf32>
    %195 = arith.addf %194, %193 : vector<1x384xf32>
    %196 = arith.divf %194, %195 : vector<1x384xf32>
    %197 = vector.extract_strided_slice %196 {offsets = [0, 0], sizes = [1, 128], strides = [1, 1]} : vector<1x384xf32> to vector<1x128xf32>
    %198 = vector.extract_strided_slice %196 {offsets = [0, 128], sizes = [1, 128], strides = [1, 1]} : vector<1x384xf32> to vector<1x128xf32>
    %199 = vector.extract_strided_slice %196 {offsets = [0, 256], sizes = [1, 128], strides = [1, 1]} : vector<1x384xf32> to vector<1x128xf32>
    %200 = vector.extract_strided_slice %190 {offsets = [0, 384], sizes = [1, 128], strides = [1, 1]} : vector<1x512xf32> to vector<1x128xf32>
    %201 = math.tanh %200 : vector<1x128xf32>
    %202 = arith.mulf %198, %181 : vector<1x128xf32>
    %203 = arith.mulf %197, %201 : vector<1x128xf32>
    %204 = arith.addf %202, %203 : vector<1x128xf32>
    %205 = math.tanh %204 : vector<1x128xf32>
    %206 = arith.mulf %199, %205 : vector<1x128xf32>
    %207 = vector.extract_strided_slice %187 {offsets = [1, 0], sizes = [1, 512], strides = [1, 1]} : vector<4x512xf32> to vector<1x512xf32>
    %cst_43 = arith.constant dense<0.000000e+00> : vector<1x512xf32>
    %208 = tpu.matmul %206, %25, %cst_43 {dimension_numbers = #tpu.dot_dimension_numbers<[1], [0], [0], [1], [0, 0, 1, 1], [], []>} : vector<1x128xf32>, vector<128x512xf32>, vector<1x512xf32> -> vector<1x512xf32>
    %209 = arith.addf %207, %208 : vector<1x512xf32>
    %210 = vector.extract_strided_slice %209 {offsets = [0, 0], sizes = [1, 384], strides = [1, 1]} : vector<1x512xf32> to vector<1x384xf32>
    %211 = arith.negf %210 : vector<1x384xf32>
    %212 = math.exp %211 : vector<1x384xf32>
    %cst_44 = arith.constant 1.000000e+00 : f32
    %213 = vector.broadcast %cst_44 : f32 to vector<1x384xf32>
    %214 = arith.addf %213, %212 : vector<1x384xf32>
    %215 = arith.divf %213, %214 : vector<1x384xf32>
    %216 = vector.extract_strided_slice %215 {offsets = [0, 0], sizes = [1, 128], strides = [1, 1]} : vector<1x384xf32> to vector<1x128xf32>
    %217 = vector.extract_strided_slice %215 {offsets = [0, 128], sizes = [1, 128], strides = [1, 1]} : vector<1x384xf32> to vector<1x128xf32>
    %218 = vector.extract_strided_slice %215 {offsets = [0, 256], sizes = [1, 128], strides = [1, 1]} : vector<1x384xf32> to vector<1x128xf32>
    %219 = vector.extract_strided_slice %209 {offsets = [0, 384], sizes = [1, 128], strides = [1, 1]} : vector<1x512xf32> to vector<1x128xf32>
    %220 = math.tanh %219 : vector<1x128xf32>
    %221 = arith.mulf %217, %204 : vector<1x128xf32>
    %222 = arith.mulf %216, %220 : vector<1x128xf32>
    %223 = arith.addf %221, %222 : vector<1x128xf32>
    %224 = math.tanh %223 : vector<1x128xf32>
    %225 = arith.mulf %218, %224 : vector<1x128xf32>
    %226 = vector.extract_strided_slice %187 {offsets = [2, 0], sizes = [1, 512], strides = [1, 1]} : vector<4x512xf32> to vector<1x512xf32>
    %cst_45 = arith.constant dense<0.000000e+00> : vector<1x512xf32>
    %227 = tpu.matmul %225, %25, %cst_45 {dimension_numbers = #tpu.dot_dimension_numbers<[1], [0], [0], [1], [0, 0, 1, 1], [], []>} : vector<1x128xf32>, vector<128x512xf32>, vector<1x512xf32> -> vector<1x512xf32>
    %228 = arith.addf %226, %227 : vector<1x512xf32>
    %229 = vector.extract_strided_slice %228 {offsets = [0, 0], sizes = [1, 384], strides = [1, 1]} : vector<1x512xf32> to vector<1x384xf32>
    %230 = arith.negf %229 : vector<1x384xf32>
    %231 = math.exp %230 : vector<1x384xf32>
    %cst_46 = arith.constant 1.000000e+00 : f32
    %232 = vector.broadcast %cst_46 : f32 to vector<1x384xf32>
    %233 = arith.addf %232, %231 : vector<1x384xf32>
    %234 = arith.divf %232, %233 : vector<1x384xf32>
    %235 = vector.extract_strided_slice %234 {offsets = [0, 0], sizes = [1, 128], strides = [1, 1]} : vector<1x384xf32> to vector<1x128xf32>
    %236 = vector.extract_strided_slice %234 {offsets = [0, 128], sizes = [1, 128], strides = [1, 1]} : vector<1x384xf32> to vector<1x128xf32>
    %237 = vector.extract_strided_slice %234 {offsets = [0, 256], sizes = [1, 128], strides = [1, 1]} : vector<1x384xf32> to vector<1x128xf32>
    %238 = vector.extract_strided_slice %228 {offsets = [0, 384], sizes = [1, 128], strides = [1, 1]} : vector<1x512xf32> to vector<1x128xf32>
    %239 = math.tanh %238 : vector<1x128xf32>
    %240 = arith.mulf %236, %223 : vector<1x128xf32>
    %241 = arith.mulf %235, %239 : vector<1x128xf32>
    %242 = arith.addf %240, %241 : vector<1x128xf32>
    %243 = math.tanh %242 : vector<1x128xf32>
    %244 = arith.mulf %237, %243 : vector<1x128xf32>
    %245 = vector.extract_strided_slice %187 {offsets = [3, 0], sizes = [1, 512], strides = [1, 1]} : vector<4x512xf32> to vector<1x512xf32>
    %cst_47 = arith.constant dense<0.000000e+00> : vector<1x512xf32>
    %246 = tpu.matmul %244, %25, %cst_47 {dimension_numbers = #tpu.dot_dimension_numbers<[1], [0], [0], [1], [0, 0, 1, 1], [], []>} : vector<1x128xf32>, vector<128x512xf32>, vector<1x512xf32> -> vector<1x512xf32>
    %247 = arith.addf %245, %246 : vector<1x512xf32>
    %248 = vector.extract_strided_slice %247 {offsets = [0, 0], sizes = [1, 384], strides = [1, 1]} : vector<1x512xf32> to vector<1x384xf32>
    %249 = arith.negf %248 : vector<1x384xf32>
    %250 = math.exp %249 : vector<1x384xf32>
    %cst_48 = arith.constant 1.000000e+00 : f32
    %251 = vector.broadcast %cst_48 : f32 to vector<1x384xf32>
    %252 = arith.addf %251, %250 : vector<1x384xf32>
    %253 = arith.divf %251, %252 : vector<1x384xf32>
    %254 = vector.extract_strided_slice %253 {offsets = [0, 0], sizes = [1, 128], strides = [1, 1]} : vector<1x384xf32> to vector<1x128xf32>
    %255 = vector.extract_strided_slice %253 {offsets = [0, 128], sizes = [1, 128], strides = [1, 1]} : vector<1x384xf32> to vector<1x128xf32>
    %256 = vector.extract_strided_slice %253 {offsets = [0, 256], sizes = [1, 128], strides = [1, 1]} : vector<1x384xf32> to vector<1x128xf32>
    %257 = vector.extract_strided_slice %247 {offsets = [0, 384], sizes = [1, 128], strides = [1, 1]} : vector<1x512xf32> to vector<1x128xf32>
    %258 = math.tanh %257 : vector<1x128xf32>
    %259 = arith.mulf %255, %242 : vector<1x128xf32>
    %260 = arith.mulf %254, %258 : vector<1x128xf32>
    %261 = arith.addf %259, %260 : vector<1x128xf32>
    %262 = math.tanh %261 : vector<1x128xf32>
    %263 = arith.mulf %256, %262 : vector<1x128xf32>
    %264 = tpu.concatenate %206, %225, %244, %263 in 0 : vector<1x128xf32>, vector<1x128xf32>, vector<1x128xf32>, vector<1x128xf32> -> vector<4x128xf32>
    %c8_49 = arith.constant 8 : index
    %c0_50 = arith.constant 0 : index
    %265 = vector.load %arg7[%c8_49, %c0_50] : memref<12x128xf32, #tpu.memory_space<vmem>>, vector<4x128xf32>
    tpu.vector_store %arg7[%c8_49, %c0_50], %264 {strides = array<i32>} : memref<12x128xf32, #tpu.memory_space<vmem>>, vector<4x128xf32>,
    %266 = tpu.concatenate %263, %261 in 0 : vector<1x128xf32>, vector<1x128xf32> -> vector<2x128xf32>
    %c0_51 = arith.constant 0 : index
    %c0_52 = arith.constant 0 : index
    %267 = vector.load %arg8[%c0_51, %c0_52] : memref<2x128xf32, #tpu.memory_space<vmem>>, vector<2x128xf32>
    tpu.vector_store %arg8[%c0_51, %c0_52], %266 {strides = array<i32>} : memref<2x128xf32, #tpu.memory_space<vmem>>, vector<2x128xf32>,
    return
  }
}

</mosaic_0001>

<llo_original>
// kernel: tpu_custom_call.1
$region0: #{tpu_custom_call.1}
  #allocation0 [shape = 'u32[]', space=smem, size = 0x4, offset = 0x4, fixed_abs, tag = 'smem constant byte address 0x4 - core index']
  #allocation1 [shape = 'u32[72,128]{1,0:T(1,128)}', space=vmem, size = 0x9000, scoped, tag = 'internal scratch']
  #allocation2 [shape = 'f32[128,512]{1,0:T(8,128)}', space=vmem, size = 0x40000, scoped, tag = 'scratch operand']
  #allocation3 [shape = 'f32[1,512]{1,0:T(1,128)}', space=vmem, size = 0x800, scoped, tag = 'scratch operand']
  #allocation4 [shape = 'f32[128,512]{1,0:T(8,128)}', space=vmem, size = 0x40000, scoped, tag = 'scratch operand']
  #allocation5 [shape = 'f32[12,512]{1,0:T(8,128)}', space=vmem, size = 0x8000, scoped, tag = 'scratch operand']
  #allocation6 [shape = 's32[3]{0}', space=sflag, size = 0xc, scoped, tag = 'scratch operand']
  #allocation15 [shape = 's32[]', space=sflag, size = 0x4, offset = 0, fixed_abs, tag = 'sflag constant byte address 0x0 - dummy sync flag']
  #allocation16 [shape = 's32[]', space=sflag, size = 0x4, offset = 0, fixed_abs, tag = 'sflag constant byte address 0x0 - dummy sync flag']
  #allocation17 [shape = 'u32[]', space=smem, size = 0x4, offset = 0x44, fixed_abs, tag = 'smem constant byte address 0x44 - assertion arg 0']
  #allocation18 [shape = 'u32[]', space=smem, size = 0x4, offset = 0x48, fixed_abs, tag = 'smem constant byte address 0x48 - assertion arg 1']
  #allocation19 [shape = 's32[]', space=sflag, size = 0x4, offset = 0, fixed_abs, tag = 'sflag constant byte address 0x0 - dummy sync flag']
  #allocation20 [shape = 's32[]', space=sflag, size = 0x4, offset = 0, fixed_abs, tag = 'sflag constant byte address 0x0 - dummy sync flag']
  #allocation21 [shape = 's32[]', space=sflag, size = 0x4, offset = 0, fixed_abs, tag = 'sflag constant byte address 0x0 - dummy sync flag']
  #allocation22 [shape = 's32[]', space=sflag, size = 0x4, offset = 0, fixed_abs, tag = 'sflag constant byte address 0x0 - dummy sync flag']
  %s0 = inlined_call_operand.hbm [shape: f32[12,32], index: 0, kind: input, shape index: {}]
  %s1 = inlined_call_operand.hbm [shape: f32[32,128], index: 1, kind: input, shape index: {}]
  %s2 = inlined_call_operand.vmem [shape: f32[1,128], index: 2, kind: input, shape index: {}]
  %s3 = inlined_call_operand.hbm [shape: f32[128,512], index: 3, kind: input, shape index: {}]
  %s4 = inlined_call_operand.hbm [shape: f32[1,512], index: 4, kind: input, shape index: {}]
  %s5 = inlined_call_operand.hbm [shape: f32[128,512], index: 5, kind: input, shape index: {}]
  %s6 = inlined_call_operand.vmem [shape: f32[2,128], index: 6, kind: input, shape index: {}]
  %s7 = inlined_call_operand.hbm [shape: f32[12,128], index: 7, kind: output, shape index: {0}]
  %s8 = inlined_call_operand.hbm [shape: f32[2,128], index: 8, kind: output, shape index: {1}]
  %9 = xla_tuple %s7, %s8
  %s10 = sld [smem:[#allocation0]]
  $region54: #{tpu_custom_call.1} parent=0
    _
  %s12 = ssub.s32 1, %s10
  %s13 = scalar_select 0, %s12, %s10
  $region1: #{tpu_custom_call.1} parent=0
    #allocation7 [shape = 'u8[8192]{0}', space=vmem, size = 0x2000, scoped, tag = 'input window, operand 0, single buffered']
    #allocation8 [shape = 's32[1]{0}', space=sflag, size = 0x4, scoped, tag = 'scoped memory for tpu_custom_call.1']
    #allocation9 [shape = 's32[1]{0}', space=sflag, size = 0x4, scoped, tag = 'scoped memory for tpu_custom_call.1']
    #allocation10 [shape = 'u8[16384]{0}', space=vmem, size = 0x4000, scoped, tag = 'input window, operand 1, single buffered']
    #allocation11 [shape = 's32[1]{0}', space=sflag, size = 0x4, scoped, tag = 'scoped memory for tpu_custom_call.1']
    #allocation12 [shape = 'u8[8192]{0}', space=vmem, size = 0x2000, scoped, tag = 'output window, operand 0, single buffered']
    #allocation13 [shape = 'u8[1024]{0}', space=vmem, size = 0x400, scoped, tag = 'output window, operand 1, single buffered']
    #allocation14 [shape = 's32[1]{0}', space=sflag, size = 0x4, scoped, tag = 'scoped memory for tpu_custom_call.1']
    %14 = vsyncpa [#allocation8], 0
    %15 = vsyncpa [#allocation11], 0
    %16 = vsyncpa [#allocation9], 0
    %17 = vsyncpa [#allocation14], 0
    // Predicated region
    $region2: #{tpu_custom_call.1} parent=1 // pred_check
      _
    $region3: #{tpu_custom_call.1} parent=1 // pred_check_branch
      %19 = sbr.rel (0) target = $region5
    $region4: #{tpu_custom_call.1} parent=1 // pred_region
      %21 = vsyncadd [#allocation8], 0
      %s22 = sshll.u32 %s0, 4
      %s23 = int_to_ptr.hbm [resolvable:$true] %s22
      %s24 = sshll.u32 [#allocation7], 4
      %s25 = int_to_ptr.vmem [resolvable:$true] %s24
      %30 = dma.hbm_to_vmem [thread:$0]  %s23, 256, %s25, [#allocation8], 128, 128, 8
    $region5: #{tpu_custom_call.1} parent=1 // pred_fallthru
      _
    // Predicated region
    $region6: #{tpu_custom_call.1} parent=1 // pred_check
      _
    $region7: #{tpu_custom_call.1} parent=1 // pred_check_branch
      %32 = sbr.rel (0) target = $region9
    $region8: #{tpu_custom_call.1} parent=1 // pred_region
      %34 = vsyncadd [#allocation11], 0
      %s35 = sshll.u32 %s1, 4
      %s36 = int_to_ptr.hbm [resolvable:$true] %s35
      %s37 = sshll.u32 [#allocation10], 4
      %s38 = int_to_ptr.vmem [resolvable:$true] %s37
      %43 = dma.hbm_to_vmem [thread:$0]  %s36, 512, %s38, [#allocation11], 128, 128, 8
    $region9: #{tpu_custom_call.1} parent=1 // pred_fallthru
      _
    // Predicated region
    $region10: #{tpu_custom_call.1} parent=1 // pred_check
      _
    $region11: #{tpu_custom_call.1} parent=1 // pred_check_branch
      %45 = sbr.rel (0) target = $region13
    $region12: #{tpu_custom_call.1} parent=1 // pred_region
      _
    $region13: #{tpu_custom_call.1} parent=1 // pred_fallthru
      _
    // Predicated region
    $region14: #{tpu_custom_call.1} parent=1 // pred_check
      _
    $region15: #{tpu_custom_call.1} parent=1 // pred_check_branch
      %47 = sbr.rel (0) target = $region17
    $region16: #{tpu_custom_call.1} parent=1 // pred_region
      _
    $region17: #{tpu_custom_call.1} parent=1 // pred_fallthru
      _
    // Predicated region
    $region18: #{tpu_custom_call.1} parent=1 // pred_check
      _
    $region19: #{tpu_custom_call.1} parent=1 // pred_check_branch
      %49 = sbr.rel (0) target = $region21
    $region20: #{tpu_custom_call.1} parent=1 // pred_region
      %51 = dma.done [#allocation8], 256
    $region21: #{tpu_custom_call.1} parent=1 // pred_fallthru
      _
    // Predicated region
    $region22: #{tpu_custom_call.1} parent=1 // pred_check
      _
    $region23: #{tpu_custom_call.1} parent=1 // pred_check_branch
      %53 = sbr.rel (0) target = $region25
    $region24: #{tpu_custom_call.1} parent=1 // pred_region
      %55 = dma.done [#allocation11], 512
    $region25: #{tpu_custom_call.1} parent=1 // pred_fallthru
      _
    // Predicated region
    $region26: #{tpu_custom_call.1} parent=1 // pred_check
      _
    $region27: #{tpu_custom_call.1} parent=1 // pred_check_branch
      %57 = sbr.rel target = $region29
    $region28: #{tpu_custom_call.1} parent=1 // pred_region
      %58 = sst [smem:[#allocation17]] [#allocation16]
      %59 = sst [smem:[#allocation18]] [#allocation15]
    $region29: #{tpu_custom_call.1} parent=1 // pred_fallthru
      _
    %61 = shalt.err (0)
    %s63 = sshll.u32 %s3, 4
    %s64 = int_to_ptr.hbm [resolvable:$true] %s63
    %s65 = sshll.u32 [#allocation2], 4
    %s66 = int_to_ptr.vmem [resolvable:$true] %s65
    %68 = dma.hbm_to_vmem [thread:$0]  %s64, 8192, %s66, [#allocation6]
    %s69 = scalar_lea.sflag [#allocation6], 1
    // Predicated region
    $region30: #{tpu_custom_call.1} parent=1 // pred_check
      _
    $region31: #{tpu_custom_call.1} parent=1 // pred_check_branch
      %71 = sbr.rel target = $region33
    $region32: #{tpu_custom_call.1} parent=1 // pred_region
      %72 = sst [smem:[#allocation17]] [#allocation20]
      %73 = sst [smem:[#allocation18]] [#allocation19]
    $region33: #{tpu_custom_call.1} parent=1 // pred_fallthru
      _
    %75 = shalt.err (0)
    %s77 = sshll.u32 %s4, 4
    %s78 = int_to_ptr.hbm [resolvable:$true] %s77
    %s79 = sshll.u32 [#allocation3], 4
    %s80 = int_to_ptr.vmem [resolvable:$true] %s79
    %82 = dma.hbm_to_vmem [thread:$0]  %s78, 64, %s80, %s69
    %s83 = scalar_lea.sflag [#allocation6], 2
    // Predicated region
    $region34: #{tpu_custom_call.1} parent=1 // pred_check
      _
    $region35: #{tpu_custom_call.1} parent=1 // pred_check_branch
      %85 = sbr.rel target = $region37
    $region36: #{tpu_custom_call.1} parent=1 // pred_region
      %86 = sst [smem:[#allocation17]] [#allocation22]
      %87 = sst [smem:[#allocation18]] [#allocation21]
    $region37: #{tpu_custom_call.1} parent=1 // pred_fallthru
      _
    %89 = shalt.err (0)
    %s91 = sshll.u32 %s5, 4
    %s92 = int_to_ptr.hbm [resolvable:$true] %s91
    %s93 = sshll.u32 [#allocation4], 4
    %s94 = int_to_ptr.vmem [resolvable:$true] %s93
    %96 = dma.hbm_to_vmem [thread:$0]  %s92, 8192, %s94, %s83
    %v97 = vld [vmem:[#allocation7] sm:$0xff]
    %v98 = vld [vmem:[#allocation7 + $0x8] sm:$0xf]
    %v99 = vld [vmem:[#allocation10] sm:$0xff]
    %v100 = vld [vmem:[#allocation10 + $0x8] sm:$0xff]
    %v101 = vld [vmem:[#allocation10 + $0x10] sm:$0xff]
    %v102 = vld [vmem:[#allocation10 + $0x18] sm:$0xff]
    %v103 = vld [vmem:[%s2] sm:$0x1]
    %v105 = vperm.slane %v103, 0
    %vm107 = vcmask 261120
    %v109 = vsel %vm107, %v97, 0
    %v112 = vsel %vm107, %v98, 0
    %114 = vmatpush.msra.mxu0 0.0
    %115 = vmatpush.msra.mxu0 0.0
    %116 = vmatpush.msra.mxu0 0.0
    %117 = vmatpush.msra.mxu0 0.0
    %118 = vmatpush.msra.mxu0 0.0
    %119 = vmatpush.msra.mxu0 0.0
    %120 = vmatpush.msra.mxu0 0.0
    %121 = vmatpush.msra.mxu0 0.0
    %122 = vmatpush.msra.mxu0 0.0
    %123 = vmatpush.msra.mxu0 0.0
    %124 = vmatpush.msra.mxu0 0.0
    %125 = vmatpush.msra.mxu0 0.0
    %126 = vmatpush.msra.mxu0 %v102
    %127 = vmatpush.msra.mxu0 %v101
    %128 = vmatpush.msra.mxu0 %v100
    %129 = vmatpush.msra.mxu0 %v99
    %130 = vmatmul.f32.gmra.mxu0 %v109
    %v131 = vpop.f32.mrf.mxu0
    %v132 = vadd.f32 %v105, %v131
    %133 = vmatmul.f32.gmra.mxu0 %v112
    %v134 = vpop.f32.mrf.mxu0
    %v135 = vadd.f32 %v105, %v134
    %136 = vdwg.mxu0
    %v137 = vtanh.pop %v132
    %v138 = vtanh.pop %v135
    %s139 = smul.u32 8, 16
    %s140 = smul.u32 %s139, 4
    %s141 = sshll.u32 %s140, 4
    %142 = dma.done [#allocation6], %s141
    %s143 = smul.u32 1, 4
    %s144 = sshll.u32 %s143, 4
    %145 = dma.done %s69, %s144
    %v146 = vld [vmem:[#allocation2] sm:$0xff]
    %v147 = vld [vmem:[#allocation2 + $0x8] sm:$0xff]
    %v148 = vld [vmem:[#allocation2 + $0x10] sm:$0xff]
    %v149 = vld [vmem:[#allocation2 + $0x18] sm:$0xff]
    %v150 = vld [vmem:[#allocation2 + $0x20] sm:$0xff]
    %v151 = vld [vmem:[#allocation2 + $0x28] sm:$0xff]
    %v152 = vld [vmem:[#allocation2 + $0x30] sm:$0xff]
    %v153 = vld [vmem:[#allocation2 + $0x38] sm:$0xff]
    %v154 = vld [vmem:[#allocation2 + $0x40] sm:$0xff]
    %v155 = vld [vmem:[#allocation2 + $0x48] sm:$0xff]
    %v156 = vld [vmem:[#allocation2 + $0x50] sm:$0xff]
    %v157 = vld [vmem:[#allocation2 + $0x58] sm:$0xff]
    %v158 = vld [vmem:[#allocation2 + $0x60] sm:$0xff]
    %v159 = vld [vmem:[#allocation2 + $0x68] sm:$0xff]
    %v160 = vld [vmem:[#allocation2 + $0x70] sm:$0xff]
    %v161 = vld [vmem:[#allocation2 + $0x78] sm:$0xff]
    %v162 = vld [vmem:[#allocation2 + $0x80] sm:$0xff]
    %v163 = vld [vmem:[#allocation2 + $0x88] sm:$0xff]
    %v164 = vld [vmem:[#allocation2 + $0x90] sm:$0xff]
    %v165 = vld [vmem:[#allocation2 + $0x98] sm:$0xff]
    %v166 = vld [vmem:[#allocation2 + $0xa0] sm:$0xff]
    %v167 = vld [vmem:[#allocation2 + $0xa8] sm:$0xff]
    %v168 = vld [vmem:[#allocation2 + $0xb0] sm:$0xff]
    %v169 = vld [vmem:[#allocation2 + $0xb8] sm:$0xff]
    %v170 = vld [vmem:[#allocation2 + $0xc0] sm:$0xff]
    %v171 = vld [vmem:[#allocation2 + $0xc8] sm:$0xff]
    %v172 = vld [vmem:[#allocation2 + $0xd0] sm:$0xff]
    %v173 = vld [vmem:[#allocation2 + $0xd8] sm:$0xff]
    %v174 = vld [vmem:[#allocation2 + $0xe0] sm:$0xff]
    %v175 = vld [vmem:[#allocation2 + $0xe8] sm:$0xff]
    %v176 = vld [vmem:[#allocation2 + $0xf0] sm:$0xff]
    %v177 = vld [vmem:[#allocation2 + $0xf8] sm:$0xff]
    %v178 = vld [vmem:[#allocation2 + $0x100] sm:$0xff]
    %v179 = vld [vmem:[#allocation2 + $0x108] sm:$0xff]
    %v180 = vld [vmem:[#allocation2 + $0x110] sm:$0xff]
    %v181 = vld [vmem:[#allocation2 + $0x118] sm:$0xff]
    %v182 = vld [vmem:[#allocation2 + $0x120] sm:$0xff]
    %v183 = vld [vmem:[#allocation2 + $0x128] sm:$0xff]
    %v184 = vld [vmem:[#allocation2 + $0x130] sm:$0xff]
    %v185 = vld [vmem:[#allocation2 + $0x138] sm:$0xff]
    %v186 = vld [vmem:[#allocation2 + $0x140] sm:$0xff]
    %v187 = vld [vmem:[#allocation2 + $0x148] sm:$0xff]
    %v188 = vld [vmem:[#allocation2 + $0x150] sm:$0xff]
    %v189 = vld [vmem:[#allocation2 + $0x158] sm:$0xff]
    %v190 = vld [vmem:[#allocation2 + $0x160] sm:$0xff]
    %v191 = vld [vmem:[#allocation2 + $0x168] sm:$0xff]
    %v192 = vld [vmem:[#allocation2 + $0x170] sm:$0xff]
    %v193 = vld [vmem:[#allocation2 + $0x178] sm:$0xff]
    %v194 = vld [vmem:[#allocation2 + $0x180] sm:$0xff]
    %v195 = vld [vmem:[#allocation2 + $0x188] sm:$0xff]
    %v196 = vld [vmem:[#allocation2 + $0x190] sm:$0xff]
    %v197 = vld [vmem:[#allocation2 + $0x198] sm:$0xff]
    %v198 = vld [vmem:[#allocation2 + $0x1a0] sm:$0xff]
    %v199 = vld [vmem:[#allocation2 + $0x1a8] sm:$0xff]
    %v200 = vld [vmem:[#allocation2 + $0x1b0] sm:$0xff]
    %v201 = vld [vmem:[#allocation2 + $0x1b8] sm:$0xff]
    %v202 = vld [vmem:[#allocation2 + $0x1c0] sm:$0xff]
    %v203 = vld [vmem:[#allocation2 + $0x1c8] sm:$0xff]
    %v204 = vld [vmem:[#allocation2 + $0x1d0] sm:$0xff]
    %v205 = vld [vmem:[#allocation2 + $0x1d8] sm:$0xff]
    %v206 = vld [vmem:[#allocation2 + $0x1e0] sm:$0xff]
    %v207 = vld [vmem:[#allocation2 + $0x1e8] sm:$0xff]
    %v208 = vld [vmem:[#allocation2 + $0x1f0] sm:$0xff]
    %v209 = vld [vmem:[#allocation2 + $0x1f8] sm:$0xff]
    %v210 = vld [vmem:[#allocation3] sm:$0xf]
    %v212 = vperm.slane %v210, 0
    %v213 = vperm.slane %v210, 1
    %v214 = vperm.slane %v210, 2
    %v215 = vperm.slane %v210, 3
    %220 = vmatpush.msra.mxu0 %v206
    %221 = vmatpush.msra.mxu0 %v202
    %222 = vmatpush.msra.mxu0 %v198
    %223 = vmatpush.msra.mxu0 %v194
    %224 = vmatpush.msra.mxu0 %v190
    %225 = vmatpush.msra.mxu0 %v186
    %226 = vmatpush.msra.mxu0 %v182
    %227 = vmatpush.msra.mxu0 %v178
    %228 = vmatpush.msra.mxu0 %v174
    %229 = vmatpush.msra.mxu0 %v170
    %230 = vmatpush.msra.mxu0 %v166
    %231 = vmatpush.msra.mxu0 %v162
    %232 = vmatpush.msra.mxu0 %v158
    %233 = vmatpush.msra.mxu0 %v154
    %234 = vmatpush.msra.mxu0 %v150
    %235 = vmatpush.msra.mxu0 %v146
    %236 = vmatmul.f32.gmra.mxu0 %v137
    %v237 = vpop.f32.mrf.mxu0
    %v238 = vadd.f32 %v212, %v237
    %239 = vmatmul.f32.gmra.mxu0 %v138
    %v240 = vpop.f32.mrf.mxu0
    %v241 = vadd.f32 %v212, %v240
    %242 = vdwg.mxu0
    %243 = vmatpush.msra.mxu0 %v207
    %244 = vmatpush.msra.mxu0 %v203
    %245 = vmatpush.msra.mxu0 %v199
    %246 = vmatpush.msra.mxu0 %v195
    %247 = vmatpush.msra.mxu0 %v191
    %248 = vmatpush.msra.mxu0 %v187
    %249 = vmatpush.msra.mxu0 %v183
    %250 = vmatpush.msra.mxu0 %v179
    %251 = vmatpush.msra.mxu0 %v175
    %252 = vmatpush.msra.mxu0 %v171
    %253 = vmatpush.msra.mxu0 %v167
    %254 = vmatpush.msra.mxu0 %v163
    %255 = vmatpush.msra.mxu0 %v159
    %256 = vmatpush.msra.mxu0 %v155
    %257 = vmatpush.msra.mxu0 %v151
    %258 = vmatpush.msra.mxu0 %v147
    %259 = vmatmul.f32.gmra.mxu0 %v137
    %v260 = vpop.f32.mrf.mxu0
    %v261 = vadd.f32 %v213, %v260
    %262 = vmatmul.f32.gmra.mxu0 %v138
    %v263 = vpop.f32.mrf.mxu0
    %v264 = vadd.f32 %v213, %v263
    %265 = vdwg.mxu0
    %266 = vmatpush.msra.mxu0 %v208
    %267 = vmatpush.msra.mxu0 %v204
    %268 = vmatpush.msra.mxu0 %v200
    %269 = vmatpush.msra.mxu0 %v196
    %270 = vmatpush.msra.mxu0 %v192
    %271 = vmatpush.msra.mxu0 %v188
    %272 = vmatpush.msra.mxu0 %v184
    %273 = vmatpush.msra.mxu0 %v180
    %274 = vmatpush.msra.mxu0 %v176
    %275 = vmatpush.msra.mxu0 %v172
    %276 = vmatpush.msra.mxu0 %v168
    %277 = vmatpush.msra.mxu0 %v164
    %278 = vmatpush.msra.mxu0 %v160
    %279 = vmatpush.msra.mxu0 %v156
    %280 = vmatpush.msra.mxu0 %v152
    %281 = vmatpush.msra.mxu0 %v148
    %282 = vmatmul.f32.gmra.mxu0 %v137
    %v283 = vpop.f32.mrf.mxu0
    %v284 = vadd.f32 %v214, %v283
    %285 = vmatmul.f32.gmra.mxu0 %v138
    %v286 = vpop.f32.mrf.mxu0
    %v287 = vadd.f32 %v214, %v286
    %288 = vdwg.mxu0
    %289 = vmatpush.msra.mxu0 %v209
    %290 = vmatpush.msra.mxu0 %v205
    %291 = vmatpush.msra.mxu0 %v201
    %292 = vmatpush.msra.mxu0 %v197
    %293 = vmatpush.msra.mxu0 %v193
    %294 = vmatpush.msra.mxu0 %v189
    %295 = vmatpush.msra.mxu0 %v185
    %296 = vmatpush.msra.mxu0 %v181
    %297 = vmatpush.msra.mxu0 %v177
    %298 = vmatpush.msra.mxu0 %v173
    %299 = vmatpush.msra.mxu0 %v169
    %300 = vmatpush.msra.mxu0 %v165
    %301 = vmatpush.msra.mxu0 %v161
    %302 = vmatpush.msra.mxu0 %v157
    %303 = vmatpush.msra.mxu0 %v153
    %304 = vmatpush.msra.mxu0 %v149
    %305 = vmatmul.f32.gmra.mxu0 %v137
    %v306 = vpop.f32.mrf.mxu0
    %v307 = vadd.f32 %v215, %v306
    %308 = vmatmul.f32.gmra.mxu0 %v138
    %v309 = vpop.f32.mrf.mxu0
    %v310 = vadd.f32 %v215, %v309
    %311 = vdwg.mxu0
    %312 = vst [vmem:[#allocation5] sm:$0xff] %v238
    %313 = vst [vmem:[#allocation5 + $0x8] sm:$0xff] %v261
    %314 = vst [vmem:[#allocation5 + $0x10] sm:$0xff] %v284
    %315 = vst [vmem:[#allocation5 + $0x18] sm:$0xff] %v307
    %316 = vst [vmem:[#allocation5 + $0x20] sm:$0xf] %v241
    %317 = vst [vmem:[#allocation5 + $0x28] sm:$0xf] %v264
    %318 = vst [vmem:[#allocation5 + $0x30] sm:$0xf] %v287
    %319 = vst [vmem:[#allocation5 + $0x38] sm:$0xf] %v310
    %s320 = sshll.u32 %s140, 4
    %321 = dma.done %s83, %s320
    %v322 = vld [vmem:[#allocation4] sm:$0xff]
    %v323 = vld [vmem:[#allocation4 + $0x8] sm:$0xff]
    %v324 = vld [vmem:[#allocation4 + $0x10] sm:$0xff]
    %v325 = vld [vmem:[#allocation4 + $0x18] sm:$0xff]
    %v326 = vld [vmem:[#allocation4 + $0x20] sm:$0xff]
    %v327 = vld [vmem:[#allocation4 + $0x28] sm:$0xff]
    %v328 = vld [vmem:[#allocation4 + $0x30] sm:$0xff]
    %v329 = vld [vmem:[#allocation4 + $0x38] sm:$0xff]
    %v330 = vld [vmem:[#allocation4 + $0x40] sm:$0xff]
    %v331 = vld [vmem:[#allocation4 + $0x48] sm:$0xff]
    %v332 = vld [vmem:[#allocation4 + $0x50] sm:$0xff]
    %v333 = vld [vmem:[#allocation4 + $0x58] sm:$0xff]
    %v334 = vld [vmem:[#allocation4 + $0x60] sm:$0xff]
    %v335 = vld [vmem:[#allocation4 + $0x68] sm:$0xff]
    %v336 = vld [vmem:[#allocation4 + $0x70] sm:$0xff]
    %v337 = vld [vmem:[#allocation4 + $0x78] sm:$0xff]
    %v338 = vld [vmem:[#allocation4 + $0x80] sm:$0xff]
    %v339 = vld [vmem:[#allocation4 + $0x88] sm:$0xff]
    %v340 = vld [vmem:[#allocation4 + $0x90] sm:$0xff]
    %v341 = vld [vmem:[#allocation4 + $0x98] sm:$0xff]
    %v342 = vld [vmem:[#allocation4 + $0xa0] sm:$0xff]
    %v343 = vld [vmem:[#allocation4 + $0xa8] sm:$0xff]
    %v344 = vld [vmem:[#allocation4 + $0xb0] sm:$0xff]
    %v345 = vld [vmem:[#allocation4 + $0xb8] sm:$0xff]
    %v346 = vld [vmem:[#allocation4 + $0xc0] sm:$0xff]
    %v347 = vld [vmem:[#allocation4 + $0xc8] sm:$0xff]
    %v348 = vld [vmem:[#allocation4 + $0xd0] sm:$0xff]
    %v349 = vld [vmem:[#allocation4 + $0xd8] sm:$0xff]
    %v350 = vld [vmem:[#allocation4 + $0xe0] sm:$0xff]
    %v351 = vld [vmem:[#allocation4 + $0xe8] sm:$0xff]
    %v352 = vld [vmem:[#allocation4 + $0xf0] sm:$0xff]
    %v353 = vld [vmem:[#allocation4 + $0xf8] sm:$0xff]
    %v354 = vld [vmem:[#allocation4 + $0x100] sm:$0xff]
    %v355 = vld [vmem:[#allocation4 + $0x108] sm:$0xff]
    %v356 = vld [vmem:[#allocation4 + $0x110] sm:$0xff]
    %v357 = vld [vmem:[#allocation4 + $0x118] sm:$0xff]
    %v358 = vld [vmem:[#allocation4 + $0x120] sm:$0xff]
    %v359 = vld [vmem:[#allocation4 + $0x128] sm:$0xff]
    %v360 = vld [vmem:[#allocation4 + $0x130] sm:$0xff]
    %v361 = vld [vmem:[#allocation4 + $0x138] sm:$0xff]
    %v362 = vld [vmem:[#allocation4 + $0x140] sm:$0xff]
    %v363 = vld [vmem:[#allocation4 + $0x148] sm:$0xff]
    %v364 = vld [vmem:[#allocation4 + $0x150] sm:$0xff]
    %v365 = vld [vmem:[#allocation4 + $0x158] sm:$0xff]
    %v366 = vld [vmem:[#allocation4 + $0x160] sm:$0xff]
    %v367 = vld [vmem:[#allocation4 + $0x168] sm:$0xff]
    %v368 = vld [vmem:[#allocation4 + $0x170] sm:$0xff]
    %v369 = vld [vmem:[#allocation4 + $0x178] sm:$0xff]
    %v370 = vld [vmem:[#allocation4 + $0x180] sm:$0xff]
    %v371 = vld [vmem:[#allocation4 + $0x188] sm:$0xff]
    %v372 = vld [vmem:[#allocation4 + $0x190] sm:$0xff]
    %v373 = vld [vmem:[#allocation4 + $0x198] sm:$0xff]
    %v374 = vld [vmem:[#allocation4 + $0x1a0] sm:$0xff]
    %v375 = vld [vmem:[#allocation4 + $0x1a8] sm:$0xff]
    %v376 = vld [vmem:[#allocation4 + $0x1b0] sm:$0xff]
    %v377 = vld [vmem:[#allocation4 + $0x1b8] sm:$0xff]
    %v378 = vld [vmem:[#allocation4 + $0x1c0] sm:$0xff]
    %v379 = vld [vmem:[#allocation4 + $0x1c8] sm:$0xff]
    %v380 = vld [vmem:[#allocation4 + $0x1d0] sm:$0xff]
    %v381 = vld [vmem:[#allocation4 + $0x1d8] sm:$0xff]
    %v382 = vld [vmem:[#allocation4 + $0x1e0] sm:$0xff]
    %v383 = vld [vmem:[#allocation4 + $0x1e8] sm:$0xff]
    %v384 = vld [vmem:[#allocation4 + $0x1f0] sm:$0xff]
    %v385 = vld [vmem:[#allocation4 + $0x1f8] sm:$0xff]
    %v386 = vld [vmem:[%s6] sm:$0x1]
    %v387 = vld [vmem:[%s6 + $0x1] sm:$0x1]
    %s388 = smul.u32 0, 4
    %s389 = smul.addr %s388, 8
    %s390 = scalar_lea.vmem [#allocation5], %s389
    %v391 = vld [vmem:[%s390] sm:$0xff]
    %v392 = vld [vmem:[%s390 + $0x8] sm:$0xff]
    %v393 = vld [vmem:[%s390 + $0x10] sm:$0xff]
    %v394 = vld [vmem:[%s390 + $0x18] sm:$0xff]
    %395 = vmatpush.msra.mxu0 %v382
    %396 = vmatpush.msra.mxu0 %v378
    %397 = vmatpush.msra.mxu0 %v374
    %398 = vmatpush.msra.mxu0 %v370
    %399 = vmatpush.msra.mxu0 %v366
    %400 = vmatpush.msra.mxu0 %v362
    %401 = vmatpush.msra.mxu0 %v358
    %402 = vmatpush.msra.mxu0 %v354
    %403 = vmatpush.msra.mxu0 %v350
    %404 = vmatpush.msra.mxu0 %v346
    %405 = vmatpush.msra.mxu0 %v342
    %406 = vmatpush.msra.mxu0 %v338
    %407 = vmatpush.msra.mxu0 %v334
    %408 = vmatpush.msra.mxu0 %v330
    %409 = vmatpush.msra.mxu0 %v326
    %410 = vmatpush.msra.mxu0 %v322
    %411 = vmatmul.f32.gmra.mxu0 %v386
    %v412 = vpop.f32.mrf.mxu0
    %v413 = vadd.f32 0.0, %v412
    %414 = vdwg.mxu0
    %415 = vmatpush.msra.mxu0 %v383
    %416 = vmatpush.msra.mxu0 %v379
    %417 = vmatpush.msra.mxu0 %v375
    %418 = vmatpush.msra.mxu0 %v371
    %419 = vmatpush.msra.mxu0 %v367
    %420 = vmatpush.msra.mxu0 %v363
    %421 = vmatpush.msra.mxu0 %v359
    %422 = vmatpush.msra.mxu0 %v355
    %423 = vmatpush.msra.mxu0 %v351
    %424 = vmatpush.msra.mxu0 %v347
    %425 = vmatpush.msra.mxu0 %v343
    %426 = vmatpush.msra.mxu0 %v339
    %427 = vmatpush.msra.mxu0 %v335
    %428 = vmatpush.msra.mxu0 %v331
    %429 = vmatpush.msra.mxu0 %v327
    %430 = vmatpush.msra.mxu0 %v323
    %431 = vmatmul.f32.gmra.mxu0 %v386
    %v432 = vpop.f32.mrf.mxu0
    %v433 = vadd.f32 0.0, %v432
    %434 = vdwg.mxu0
    %435 = vmatpush.msra.mxu0 %v384
    %436 = vmatpush.msra.mxu0 %v380
    %437 = vmatpush.msra.mxu0 %v376
    %438 = vmatpush.msra.mxu0 %v372
    %439 = vmatpush.msra.mxu0 %v368
    %440 = vmatpush.msra.mxu0 %v364
    %441 = vmatpush.msra.mxu0 %v360
    %442 = vmatpush.msra.mxu0 %v356
    %443 = vmatpush.msra.mxu0 %v352
    %444 = vmatpush.msra.mxu0 %v348
    %445 = vmatpush.msra.mxu0 %v344
    %446 = vmatpush.msra.mxu0 %v340
    %447 = vmatpush.msra.mxu0 %v336
    %448 = vmatpush.msra.mxu0 %v332
    %449 = vmatpush.msra.mxu0 %v328
    %450 = vmatpush.msra.mxu0 %v324
    %451 = vmatmul.f32.gmra.mxu0 %v386
    %v452 = vpop.f32.mrf.mxu0
    %v453 = vadd.f32 0.0, %v452
    %454 = vdwg.mxu0
    %455 = vmatpush.msra.mxu0 %v385
    %456 = vmatpush.msra.mxu0 %v381
    %457 = vmatpush.msra.mxu0 %v377
    %458 = vmatpush.msra.mxu0 %v373
    %459 = vmatpush.msra.mxu0 %v369
    %460 = vmatpush.msra.mxu0 %v365
    %461 = vmatpush.msra.mxu0 %v361
    %462 = vmatpush.msra.mxu0 %v357
    %463 = vmatpush.msra.mxu0 %v353
    %464 = vmatpush.msra.mxu0 %v349
    %465 = vmatpush.msra.mxu0 %v345
    %466 = vmatpush.msra.mxu0 %v341
    %467 = vmatpush.msra.mxu0 %v337
    %468 = vmatpush.msra.mxu0 %v333
    %469 = vmatpush.msra.mxu0 %v329
    %470 = vmatpush.msra.mxu0 %v325
    %471 = vmatmul.f32.gmra.mxu0 %v386
    %v472 = vpop.f32.mrf.mxu0
    %v473 = vadd.f32 0.0, %v472
    %474 = vdwg.mxu0
    %v475 = vadd.f32 %v391, %v413
    %v476 = vadd.f32 %v392, %v433
    %v477 = vadd.f32 %v393, %v453
    %v478 = vadd.f32 %v394, %v473
    %v479 = vxor.u32 %v475, 2147483648
    %v480 = vxor.u32 %v476, 2147483648
    %v481 = vxor.u32 %v477, 2147483648
    %v482 = vmul.f32 %v479, 1.442695
    %v483 = vpow.pop %v482
    %v484 = vmul.f32 %v480, 1.442695
    %v485 = vpow.pop %v484
    %v486 = vmul.f32 %v481, 1.442695
    %v487 = vpow.pop %v486
    %v488 = vadd.f32 %v483, 1.0
    %v489 = vadd.f32 %v485, 1.0
    %v490 = vadd.f32 %v487, 1.0
    %v491 = vrcp.pop %v488
    %v492 = vmul.f32 %v488, %v491
    %v493 = vsub.f32 1.0, %v492
    %v494 = vmul.f32 %v491, %v493
    %v495 = vadd.f32 %v491, %v494
    %vm496 = vweird.f32 %v488
    %vm497 = vweird.f32 %v491
    %vm498 = vmor %vm496, %vm497
    %v499 = vsel %vm498, %v491, %v495
    %v500 = vand.u32 2147483647, %v488
    %vm501 = vcmp.eq.f32.partialorder %v500, 8.507059e+37
    %v502 = vand.u32 %v488, 2147483648
    %v503 = vor.u32 1.1754944e-38, %v502
    %v504 = vsel %vm501, %v503, %v499
    %v505 = vmul.f32 1.0, %v504
    %v506 = vrcp.pop %v489
    %v507 = vmul.f32 %v489, %v506
    %v508 = vsub.f32 1.0, %v507
    %v509 = vmul.f32 %v506, %v508
    %v510 = vadd.f32 %v506, %v509
    %vm511 = vweird.f32 %v489
    %vm512 = vweird.f32 %v506
    %vm513 = vmor %vm511, %vm512
    %v514 = vsel %vm513, %v506, %v510
    %v515 = vand.u32 2147483647, %v489
    %vm516 = vcmp.eq.f32.partialorder %v515, 8.507059e+37
    %v517 = vand.u32 %v489, 2147483648
    %v518 = vor.u32 1.1754944e-38, %v517
    %v519 = vsel %vm516, %v518, %v514
    %v520 = vmul.f32 1.0, %v519
    %v521 = vrcp.pop %v490
    %v522 = vmul.f32 %v490, %v521
    %v523 = vsub.f32 1.0, %v522
    %v524 = vmul.f32 %v521, %v523
    %v525 = vadd.f32 %v521, %v524
    %vm526 = vweird.f32 %v490
    %vm527 = vweird.f32 %v521
    %vm528 = vmor %vm526, %vm527
    %v529 = vsel %vm528, %v521, %v525
    %v530 = vand.u32 2147483647, %v490
    %vm531 = vcmp.eq.f32.partialorder %v530, 8.507059e+37
    %v532 = vand.u32 %v490, 2147483648
    %v533 = vor.u32 1.1754944e-38, %v532
    %v534 = vsel %vm531, %v533, %v529
    %v535 = vmul.f32 1.0, %v534
    %v536 = vtanh.pop %v478
    %v537 = vmul.f32 %v520, %v387
    %v538 = vmul.f32 %v505, %v536
    %v539 = vadd.f32 %v537, %v538
    %v540 = vtanh.pop %v539
    %v541 = vmul.f32 %v535, %v540
    %542 = vmatpush.msra.mxu0 %v382
    %543 = vmatpush.msra.mxu0 %v378
    %544 = vmatpush.msra.mxu0 %v374
    %545 = vmatpush.msra.mxu0 %v370
    %546 = vmatpush.msra.mxu0 %v366
    %547 = vmatpush.msra.mxu0 %v362
    %548 = vmatpush.msra.mxu0 %v358
    %549 = vmatpush.msra.mxu0 %v354
    %550 = vmatpush.msra.mxu0 %v350
    %551 = vmatpush.msra.mxu0 %v346
    %552 = vmatpush.msra.mxu0 %v342
    %553 = vmatpush.msra.mxu0 %v338
    %554 = vmatpush.msra.mxu0 %v334
    %555 = vmatpush.msra.mxu0 %v330
    %556 = vmatpush.msra.mxu0 %v326
    %557 = vmatpush.msra.mxu0 %v322
    %558 = vmatmul.f32.gmra.mxu0 %v541
    %v559 = vpop.f32.mrf.mxu0
    %v560 = vadd.f32 0.0, %v559
    %561 = vdwg.mxu0
    %562 = vmatpush.msra.mxu0 %v383
    %563 = vmatpush.msra.mxu0 %v379
    %564 = vmatpush.msra.mxu0 %v375
    %565 = vmatpush.msra.mxu0 %v371
    %566 = vmatpush.msra.mxu0 %v367
    %567 = vmatpush.msra.mxu0 %v363
    %568 = vmatpush.msra.mxu0 %v359
    %569 = vmatpush.msra.mxu0 %v355
    %570 = vmatpush.msra.mxu0 %v351
    %571 = vmatpush.msra.mxu0 %v347
    %572 = vmatpush.msra.mxu0 %v343
    %573 = vmatpush.msra.mxu0 %v339
    %574 = vmatpush.msra.mxu0 %v335
    %575 = vmatpush.msra.mxu0 %v331
    %576 = vmatpush.msra.mxu0 %v327
    %577 = vmatpush.msra.mxu0 %v323
    %578 = vmatmul.f32.gmra.mxu0 %v541
    %v579 = vpop.f32.mrf.mxu0
    %v580 = vadd.f32 0.0, %v579
    %581 = vdwg.mxu0
    %582 = vmatpush.msra.mxu0 %v384
    %583 = vmatpush.msra.mxu0 %v380
    %584 = vmatpush.msra.mxu0 %v376
    %585 = vmatpush.msra.mxu0 %v372
    %586 = vmatpush.msra.mxu0 %v368
    %587 = vmatpush.msra.mxu0 %v364
    %588 = vmatpush.msra.mxu0 %v360
    %589 = vmatpush.msra.mxu0 %v356
    %590 = vmatpush.msra.mxu0 %v352
    %591 = vmatpush.msra.mxu0 %v348
    %592 = vmatpush.msra.mxu0 %v344
    %593 = vmatpush.msra.mxu0 %v340
    %594 = vmatpush.msra.mxu0 %v336
    %595 = vmatpush.msra.mxu0 %v332
    %596 = vmatpush.msra.mxu0 %v328
    %597 = vmatpush.msra.mxu0 %v324
    %598 = vmatmul.f32.gmra.mxu0 %v541
    %v599 = vpop.f32.mrf.mxu0
    %v600 = vadd.f32 0.0, %v599
    %601 = vdwg.mxu0
    %602 = vmatpush.msra.mxu0 %v385
    %603 = vmatpush.msra.mxu0 %v381
    %604 = vmatpush.msra.mxu0 %v377
    %605 = vmatpush.msra.mxu0 %v373
    %606 = vmatpush.msra.mxu0 %v369
    %607 = vmatpush.msra.mxu0 %v365
    %608 = vmatpush.msra.mxu0 %v361
    %609 = vmatpush.msra.mxu0 %v357
    %610 = vmatpush.msra.mxu0 %v353
    %611 = vmatpush.msra.mxu0 %v349
    %612 = vmatpush.msra.mxu0 %v345
    %613 = vmatpush.msra.mxu0 %v341
    %614 = vmatpush.msra.mxu0 %v337
    %615 = vmatpush.msra.mxu0 %v333
    %616 = vmatpush.msra.mxu0 %v329
    %617 = vmatpush.msra.mxu0 %v325
    %618 = vmatmul.f32.gmra.mxu0 %v541
    %v619 = vpop.f32.mrf.mxu0
    %v620 = vadd.f32 0.0, %v619
    %621 = vdwg.mxu0
    %v626 = vrot.slane %v560, 7
    %v627 = vrot.slane %v580, 7
    %v628 = vrot.slane %v600, 7
    %v629 = vrot.slane %v620, 7
    %v634 = vadd.f32 %v391, %v626
    %v635 = vadd.f32 %v392, %v627
    %v636 = vadd.f32 %v393, %v628
    %v637 = vadd.f32 %v394, %v629
    %v638 = vxor.u32 %v634, 2147483648
    %v639 = vxor.u32 %v635, 2147483648
    %v640 = vxor.u32 %v636, 2147483648
    %v641 = vmul.f32 %v638, 1.442695
    %v642 = vpow.pop %v641
    %v643 = vmul.f32 %v639, 1.442695
    %v644 = vpow.pop %v643
    %v645 = vmul.f32 %v640, 1.442695
    %v646 = vpow.pop %v645
    %v647 = vadd.f32 %v642, 1.0
    %v648 = vadd.f32 %v644, 1.0
    %v649 = vadd.f32 %v646, 1.0
    %v650 = vrcp.pop %v647
    %v651 = vmul.f32 %v647, %v650
    %v652 = vsub.f32 1.0, %v651
    %v653 = vmul.f32 %v650, %v652
    %v654 = vadd.f32 %v650, %v653
    %vm655 = vweird.f32 %v647
    %vm656 = vweird.f32 %v650
    %vm657 = vmor %vm655, %vm656
    %v658 = vsel %vm657, %v650, %v654
    %v659 = vand.u32 2147483647, %v647
    %vm660 = vcmp.eq.f32.partialorder %v659, 8.507059e+37
    %v661 = vand.u32 %v647, 2147483648
    %v662 = vor.u32 1.1754944e-38, %v661
    %v663 = vsel %vm660, %v662, %v658
    %v664 = vmul.f32 1.0, %v663
    %v665 = vrcp.pop %v648
    %v666 = vmul.f32 %v648, %v665
    %v667 = vsub.f32 1.0, %v666
    %v668 = vmul.f32 %v665, %v667
    %v669 = vadd.f32 %v665, %v668
    %vm670 = vweird.f32 %v648
    %vm671 = vweird.f32 %v665
    %vm672 = vmor %vm670, %vm671
    %v673 = vsel %vm672, %v665, %v669
    %v674 = vand.u32 2147483647, %v648
    %vm675 = vcmp.eq.f32.partialorder %v674, 8.507059e+37
    %v676 = vand.u32 %v648, 2147483648
    %v677 = vor.u32 1.1754944e-38, %v676
    %v678 = vsel %vm675, %v677, %v673
    %v679 = vmul.f32 1.0, %v678
    %v680 = vrcp.pop %v649
    %v681 = vmul.f32 %v649, %v680
    %v682 = vsub.f32 1.0, %v681
    %v683 = vmul.f32 %v680, %v682
    %v684 = vadd.f32 %v680, %v683
    %vm685 = vweird.f32 %v649
    %vm686 = vweird.f32 %v680
    %vm687 = vmor %vm685, %vm686
    %v688 = vsel %vm687, %v680, %v684
    %v689 = vand.u32 2147483647, %v649
    %vm690 = vcmp.eq.f32.partialorder %v689, 8.507059e+37
    %v691 = vand.u32 %v649, 2147483648
    %v692 = vor.u32 1.1754944e-38, %v691
    %v693 = vsel %vm690, %v692, %v688
    %v694 = vmul.f32 1.0, %v693
    %v695 = vtanh.pop %v637
    %v697 = vrot.slane %v539, 7
    %v699 = vmul.f32 %v679, %v697
    %v700 = vmul.f32 %v664, %v695
    %v701 = vadd.f32 %v699, %v700
    %v702 = vtanh.pop %v701
    %v703 = vmul.f32 %v694, %v702
    %v705 = vrot.slane %v703, 1
    %707 = vmatpush.msra.mxu0 %v382
    %708 = vmatpush.msra.mxu0 %v378
    %709 = vmatpush.msra.mxu0 %v374
    %710 = vmatpush.msra.mxu0 %v370
    %711 = vmatpush.msra.mxu0 %v366
    %712 = vmatpush.msra.mxu0 %v362
    %713 = vmatpush.msra.mxu0 %v358
    %714 = vmatpush.msra.mxu0 %v354
    %715 = vmatpush.msra.mxu0 %v350
    %716 = vmatpush.msra.mxu0 %v346
    %717 = vmatpush.msra.mxu0 %v342
    %718 = vmatpush.msra.mxu0 %v338
    %719 = vmatpush.msra.mxu0 %v334
    %720 = vmatpush.msra.mxu0 %v330
    %721 = vmatpush.msra.mxu0 %v326
    %722 = vmatpush.msra.mxu0 %v322
    %723 = vmatmul.f32.gmra.mxu0 %v705
    %v724 = vpop.f32.mrf.mxu0
    %v725 = vadd.f32 0.0, %v724
    %726 = vdwg.mxu0
    %727 = vmatpush.msra.mxu0 %v383
    %728 = vmatpush.msra.mxu0 %v379
    %729 = vmatpush.msra.mxu0 %v375
    %730 = vmatpush.msra.mxu0 %v371
    %731 = vmatpush.msra.mxu0 %v367
    %732 = vmatpush.msra.mxu0 %v363
    %733 = vmatpush.msra.mxu0 %v359
    %734 = vmatpush.msra.mxu0 %v355
    %735 = vmatpush.msra.mxu0 %v351
    %736 = vmatpush.msra.mxu0 %v347
    %737 = vmatpush.msra.mxu0 %v343
    %738 = vmatpush.msra.mxu0 %v339
    %739 = vmatpush.msra.mxu0 %v335
    %740 = vmatpush.msra.mxu0 %v331
    %741 = vmatpush.msra.mxu0 %v327
    %742 = vmatpush.msra.mxu0 %v323
    %743 = vmatmul.f32.gmra.mxu0 %v705
    %v744 = vpop.f32.mrf.mxu0
    %v745 = vadd.f32 0.0, %v744
    %746 = vdwg.mxu0
    %747 = vmatpush.msra.mxu0 %v384
    %748 = vmatpush.msra.mxu0 %v380
    %749 = vmatpush.msra.mxu0 %v376
    %750 = vmatpush.msra.mxu0 %v372
    %751 = vmatpush.msra.mxu0 %v368
    %752 = vmatpush.msra.mxu0 %v364
    %753 = vmatpush.msra.mxu0 %v360
    %754 = vmatpush.msra.mxu0 %v356
    %755 = vmatpush.msra.mxu0 %v352
    %756 = vmatpush.msra.mxu0 %v348
    %757 = vmatpush.msra.mxu0 %v344
    %758 = vmatpush.msra.mxu0 %v340
    %759 = vmatpush.msra.mxu0 %v336
    %760 = vmatpush.msra.mxu0 %v332
    %761 = vmatpush.msra.mxu0 %v328
    %762 = vmatpush.msra.mxu0 %v324
    %763 = vmatmul.f32.gmra.mxu0 %v705
    %v764 = vpop.f32.mrf.mxu0
    %v765 = vadd.f32 0.0, %v764
    %766 = vdwg.mxu0
    %767 = vmatpush.msra.mxu0 %v385
    %768 = vmatpush.msra.mxu0 %v381
    %769 = vmatpush.msra.mxu0 %v377
    %770 = vmatpush.msra.mxu0 %v373
    %771 = vmatpush.msra.mxu0 %v369
    %772 = vmatpush.msra.mxu0 %v365
    %773 = vmatpush.msra.mxu0 %v361
    %774 = vmatpush.msra.mxu0 %v357
    %775 = vmatpush.msra.mxu0 %v353
    %776 = vmatpush.msra.mxu0 %v349
    %777 = vmatpush.msra.mxu0 %v345
    %778 = vmatpush.msra.mxu0 %v341
    %779 = vmatpush.msra.mxu0 %v337
    %780 = vmatpush.msra.mxu0 %v333
    %781 = vmatpush.msra.mxu0 %v329
    %782 = vmatpush.msra.mxu0 %v325
    %783 = vmatmul.f32.gmra.mxu0 %v705
    %v784 = vpop.f32.mrf.mxu0
    %v785 = vadd.f32 0.0, %v784
    %786 = vdwg.mxu0
    %v791 = vrot.slane %v725, 6
    %v792 = vrot.slane %v745, 6
    %v793 = vrot.slane %v765, 6
    %v794 = vrot.slane %v785, 6
    %v799 = vadd.f32 %v391, %v791
    %v800 = vadd.f32 %v392, %v792
    %v801 = vadd.f32 %v393, %v793
    %v802 = vadd.f32 %v394, %v794
    %v803 = vxor.u32 %v799, 2147483648
    %v804 = vxor.u32 %v800, 2147483648
    %v805 = vxor.u32 %v801, 2147483648
    %v806 = vmul.f32 %v803, 1.442695
    %v807 = vpow.pop %v806
    %v808 = vmul.f32 %v804, 1.442695
    %v809 = vpow.pop %v808
    %v810 = vmul.f32 %v805, 1.442695
    %v811 = vpow.pop %v810
    %v812 = vadd.f32 %v807, 1.0
    %v813 = vadd.f32 %v809, 1.0
    %v814 = vadd.f32 %v811, 1.0
    %v815 = vrcp.pop %v812
    %v816 = vmul.f32 %v812, %v815
    %v817 = vsub.f32 1.0, %v816
    %v818 = vmul.f32 %v815, %v817
    %v819 = vadd.f32 %v815, %v818
    %vm820 = vweird.f32 %v812
    %vm821 = vweird.f32 %v815
    %vm822 = vmor %vm820, %vm821
    %v823 = vsel %vm822, %v815, %v819
    %v824 = vand.u32 2147483647, %v812
    %vm825 = vcmp.eq.f32.partialorder %v824, 8.507059e+37
    %v826 = vand.u32 %v812, 2147483648
    %v827 = vor.u32 1.1754944e-38, %v826
    %v828 = vsel %vm825, %v827, %v823
    %v829 = vmul.f32 1.0, %v828
    %v830 = vrcp.pop %v813
    %v831 = vmul.f32 %v813, %v830
    %v832 = vsub.f32 1.0, %v831
    %v833 = vmul.f32 %v830, %v832
    %v834 = vadd.f32 %v830, %v833
    %vm835 = vweird.f32 %v813
    %vm836 = vweird.f32 %v830
    %vm837 = vmor %vm835, %vm836
    %v838 = vsel %vm837, %v830, %v834
    %v839 = vand.u32 2147483647, %v813
    %vm840 = vcmp.eq.f32.partialorder %v839, 8.507059e+37
    %v841 = vand.u32 %v813, 2147483648
    %v842 = vor.u32 1.1754944e-38, %v841
    %v843 = vsel %vm840, %v842, %v838
    %v844 = vmul.f32 1.0, %v843
    %v845 = vrcp.pop %v814
    %v846 = vmul.f32 %v814, %v845
    %v847 = vsub.f32 1.0, %v846
    %v848 = vmul.f32 %v845, %v847
    %v849 = vadd.f32 %v845, %v848
    %vm850 = vweird.f32 %v814
    %vm851 = vweird.f32 %v845
    %vm852 = vmor %vm850, %vm851
    %v853 = vsel %vm852, %v845, %v849
    %v854 = vand.u32 2147483647, %v814
    %vm855 = vcmp.eq.f32.partialorder %v854, 8.507059e+37
    %v856 = vand.u32 %v814, 2147483648
    %v857 = vor.u32 1.1754944e-38, %v856
    %v858 = vsel %vm855, %v857, %v853
    %v859 = vmul.f32 1.0, %v858
    %v860 = vtanh.pop %v802
    %v862 = vrot.slane %v701, 7
    %v864 = vmul.f32 %v844, %v862
    %v865 = vmul.f32 %v829, %v860
    %v866 = vadd.f32 %v864, %v865
    %v867 = vtanh.pop %v866
    %v868 = vmul.f32 %v859, %v867
    %v870 = vrot.slane %v868, 2
    %872 = vmatpush.msra.mxu0 %v382
    %873 = vmatpush.msra.mxu0 %v378
    %874 = vmatpush.msra.mxu0 %v374
    %875 = vmatpush.msra.mxu0 %v370
    %876 = vmatpush.msra.mxu0 %v366
    %877 = vmatpush.msra.mxu0 %v362
    %878 = vmatpush.msra.mxu0 %v358
    %879 = vmatpush.msra.mxu0 %v354
    %880 = vmatpush.msra.mxu0 %v350
    %881 = vmatpush.msra.mxu0 %v346
    %882 = vmatpush.msra.mxu0 %v342
    %883 = vmatpush.msra.mxu0 %v338
    %884 = vmatpush.msra.mxu0 %v334
    %885 = vmatpush.msra.mxu0 %v330
    %886 = vmatpush.msra.mxu0 %v326
    %887 = vmatpush.msra.mxu0 %v322
    %888 = vmatmul.f32.gmra.mxu0 %v870
    %v889 = vpop.f32.mrf.mxu0
    %v890 = vadd.f32 0.0, %v889
    %891 = vdwg.mxu0
    %892 = vmatpush.msra.mxu0 %v383
    %893 = vmatpush.msra.mxu0 %v379
    %894 = vmatpush.msra.mxu0 %v375
    %895 = vmatpush.msra.mxu0 %v371
    %896 = vmatpush.msra.mxu0 %v367
    %897 = vmatpush.msra.mxu0 %v363
    %898 = vmatpush.msra.mxu0 %v359
    %899 = vmatpush.msra.mxu0 %v355
    %900 = vmatpush.msra.mxu0 %v351
    %901 = vmatpush.msra.mxu0 %v347
    %902 = vmatpush.msra.mxu0 %v343
    %903 = vmatpush.msra.mxu0 %v339
    %904 = vmatpush.msra.mxu0 %v335
    %905 = vmatpush.msra.mxu0 %v331
    %906 = vmatpush.msra.mxu0 %v327
    %907 = vmatpush.msra.mxu0 %v323
    %908 = vmatmul.f32.gmra.mxu0 %v870
    %v909 = vpop.f32.mrf.mxu0
    %v910 = vadd.f32 0.0, %v909
    %911 = vdwg.mxu0
    %912 = vmatpush.msra.mxu0 %v384
    %913 = vmatpush.msra.mxu0 %v380
    %914 = vmatpush.msra.mxu0 %v376
    %915 = vmatpush.msra.mxu0 %v372
    %916 = vmatpush.msra.mxu0 %v368
    %917 = vmatpush.msra.mxu0 %v364
    %918 = vmatpush.msra.mxu0 %v360
    %919 = vmatpush.msra.mxu0 %v356
    %920 = vmatpush.msra.mxu0 %v352
    %921 = vmatpush.msra.mxu0 %v348
    %922 = vmatpush.msra.mxu0 %v344
    %923 = vmatpush.msra.mxu0 %v340
    %924 = vmatpush.msra.mxu0 %v336
    %925 = vmatpush.msra.mxu0 %v332
    %926 = vmatpush.msra.mxu0 %v328
    %927 = vmatpush.msra.mxu0 %v324
    %928 = vmatmul.f32.gmra.mxu0 %v870
    %v929 = vpop.f32.mrf.mxu0
    %v930 = vadd.f32 0.0, %v929
    %931 = vdwg.mxu0
    %932 = vmatpush.msra.mxu0 %v385
    %933 = vmatpush.msra.mxu0 %v381
    %934 = vmatpush.msra.mxu0 %v377
    %935 = vmatpush.msra.mxu0 %v373
    %936 = vmatpush.msra.mxu0 %v369
    %937 = vmatpush.msra.mxu0 %v365
    %938 = vmatpush.msra.mxu0 %v361
    %939 = vmatpush.msra.mxu0 %v357
    %940 = vmatpush.msra.mxu0 %v353
    %941 = vmatpush.msra.mxu0 %v349
    %942 = vmatpush.msra.mxu0 %v345
    %943 = vmatpush.msra.mxu0 %v341
    %944 = vmatpush.msra.mxu0 %v337
    %945 = vmatpush.msra.mxu0 %v333
    %946 = vmatpush.msra.mxu0 %v329
    %947 = vmatpush.msra.mxu0 %v325
    %948 = vmatmul.f32.gmra.mxu0 %v870
    %v949 = vpop.f32.mrf.mxu0
    %v950 = vadd.f32 0.0, %v949
    %951 = vdwg.mxu0
    %v956 = vrot.slane %v890, 5
    %v957 = vrot.slane %v910, 5
    %v958 = vrot.slane %v930, 5
    %v959 = vrot.slane %v950, 5
    %v964 = vadd.f32 %v391, %v956
    %v965 = vadd.f32 %v392, %v957
    %v966 = vadd.f32 %v393, %v958
    %v967 = vadd.f32 %v394, %v959
    %v968 = vxor.u32 %v964, 2147483648
    %v969 = vxor.u32 %v965, 2147483648
    %v970 = vxor.u32 %v966, 2147483648
    %v971 = vmul.f32 %v968, 1.442695
    %v972 = vpow.pop %v971
    %v973 = vmul.f32 %v969, 1.442695
    %v974 = vpow.pop %v973
    %v975 = vmul.f32 %v970, 1.442695
    %v976 = vpow.pop %v975
    %v977 = vadd.f32 %v972, 1.0
    %v978 = vadd.f32 %v974, 1.0
    %v979 = vadd.f32 %v976, 1.0
    %v980 = vrcp.pop %v977
    %v981 = vmul.f32 %v977, %v980
    %v982 = vsub.f32 1.0, %v981
    %v983 = vmul.f32 %v980, %v982
    %v984 = vadd.f32 %v980, %v983
    %vm985 = vweird.f32 %v977
    %vm986 = vweird.f32 %v980
    %vm987 = vmor %vm985, %vm986
    %v988 = vsel %vm987, %v980, %v984
    %v989 = vand.u32 2147483647, %v977
    %vm990 = vcmp.eq.f32.partialorder %v989, 8.507059e+37
    %v991 = vand.u32 %v977, 2147483648
    %v992 = vor.u32 1.1754944e-38, %v991
    %v993 = vsel %vm990, %v992, %v988
    %v994 = vmul.f32 1.0, %v993
    %v995 = vrcp.pop %v978
    %v996 = vmul.f32 %v978, %v995
    %v997 = vsub.f32 1.0, %v996
    %v998 = vmul.f32 %v995, %v997
    %v999 = vadd.f32 %v995, %v998
    %vm1000 = vweird.f32 %v978
    %vm1001 = vweird.f32 %v995
    %vm1002 = vmor %vm1000, %vm1001
    %v1003 = vsel %vm1002, %v995, %v999
    %v1004 = vand.u32 2147483647, %v978
    %vm1005 = vcmp.eq.f32.partialorder %v1004, 8.507059e+37
    %v1006 = vand.u32 %v978, 2147483648
    %v1007 = vor.u32 1.1754944e-38, %v1006
    %v1008 = vsel %vm1005, %v1007, %v1003
    %v1009 = vmul.f32 1.0, %v1008
    %v1010 = vrcp.pop %v979
    %v1011 = vmul.f32 %v979, %v1010
    %v1012 = vsub.f32 1.0, %v1011
    %v1013 = vmul.f32 %v1010, %v1012
    %v1014 = vadd.f32 %v1010, %v1013
    %vm1015 = vweird.f32 %v979
    %vm1016 = vweird.f32 %v1010
    %vm1017 = vmor %vm1015, %vm1016
    %v1018 = vsel %vm1017, %v1010, %v1014
    %v1019 = vand.u32 2147483647, %v979
    %vm1020 = vcmp.eq.f32.partialorder %v1019, 8.507059e+37
    %v1021 = vand.u32 %v979, 2147483648
    %v1022 = vor.u32 1.1754944e-38, %v1021
    %v1023 = vsel %vm1020, %v1022, %v1018
    %v1024 = vmul.f32 1.0, %v1023
    %v1025 = vtanh.pop %v967
    %v1027 = vrot.slane %v866, 7
    %v1029 = vmul.f32 %v1009, %v1027
    %v1030 = vmul.f32 %v994, %v1025
    %v1031 = vadd.f32 %v1029, %v1030
    %v1032 = vtanh.pop %v1031
    %v1033 = vmul.f32 %v1024, %v1032
    %v1035 = vrot.slane %v1033, 3
    %1037 = vmatpush.msra.mxu0 %v382
    %1038 = vmatpush.msra.mxu0 %v378
    %1039 = vmatpush.msra.mxu0 %v374
    %1040 = vmatpush.msra.mxu0 %v370
    %1041 = vmatpush.msra.mxu0 %v366
    %1042 = vmatpush.msra.mxu0 %v362
    %1043 = vmatpush.msra.mxu0 %v358
    %1044 = vmatpush.msra.mxu0 %v354
    %1045 = vmatpush.msra.mxu0 %v350
    %1046 = vmatpush.msra.mxu0 %v346
    %1047 = vmatpush.msra.mxu0 %v342
    %1048 = vmatpush.msra.mxu0 %v338
    %1049 = vmatpush.msra.mxu0 %v334
    %1050 = vmatpush.msra.mxu0 %v330
    %1051 = vmatpush.msra.mxu0 %v326
    %1052 = vmatpush.msra.mxu0 %v322
    %1053 = vmatmul.f32.gmra.mxu0 %v1035
    %v1054 = vpop.f32.mrf.mxu0
    %v1055 = vadd.f32 0.0, %v1054
    %1056 = vdwg.mxu0
    %1057 = vmatpush.msra.mxu0 %v383
    %1058 = vmatpush.msra.mxu0 %v379
    %1059 = vmatpush.msra.mxu0 %v375
    %1060 = vmatpush.msra.mxu0 %v371
    %1061 = vmatpush.msra.mxu0 %v367
    %1062 = vmatpush.msra.mxu0 %v363
    %1063 = vmatpush.msra.mxu0 %v359
    %1064 = vmatpush.msra.mxu0 %v355
    %1065 = vmatpush.msra.mxu0 %v351
    %1066 = vmatpush.msra.mxu0 %v347
    %1067 = vmatpush.msra.mxu0 %v343
    %1068 = vmatpush.msra.mxu0 %v339
    %1069 = vmatpush.msra.mxu0 %v335
    %1070 = vmatpush.msra.mxu0 %v331
    %1071 = vmatpush.msra.mxu0 %v327
    %1072 = vmatpush.msra.mxu0 %v323
    %1073 = vmatmul.f32.gmra.mxu0 %v1035
    %v1074 = vpop.f32.mrf.mxu0
    %v1075 = vadd.f32 0.0, %v1074
    %1076 = vdwg.mxu0
    %1077 = vmatpush.msra.mxu0 %v384
    %1078 = vmatpush.msra.mxu0 %v380
    %1079 = vmatpush.msra.mxu0 %v376
    %1080 = vmatpush.msra.mxu0 %v372
    %1081 = vmatpush.msra.mxu0 %v368
    %1082 = vmatpush.msra.mxu0 %v364
    %1083 = vmatpush.msra.mxu0 %v360
    %1084 = vmatpush.msra.mxu0 %v356
    %1085 = vmatpush.msra.mxu0 %v352
    %1086 = vmatpush.msra.mxu0 %v348
    %1087 = vmatpush.msra.mxu0 %v344
    %1088 = vmatpush.msra.mxu0 %v340
    %1089 = vmatpush.msra.mxu0 %v336
    %1090 = vmatpush.msra.mxu0 %v332
    %1091 = vmatpush.msra.mxu0 %v328
    %1092 = vmatpush.msra.mxu0 %v324
    %1093 = vmatmul.f32.gmra.mxu0 %v1035
    %v1094 = vpop.f32.mrf.mxu0
    %v1095 = vadd.f32 0.0, %v1094
    %1096 = vdwg.mxu0
    %1097 = vmatpush.msra.mxu0 %v385
    %1098 = vmatpush.msra.mxu0 %v381
    %1099 = vmatpush.msra.mxu0 %v377
    %1100 = vmatpush.msra.mxu0 %v373
    %1101 = vmatpush.msra.mxu0 %v369
    %1102 = vmatpush.msra.mxu0 %v365
    %1103 = vmatpush.msra.mxu0 %v361
    %1104 = vmatpush.msra.mxu0 %v357
    %1105 = vmatpush.msra.mxu0 %v353
    %1106 = vmatpush.msra.mxu0 %v349
    %1107 = vmatpush.msra.mxu0 %v345
    %1108 = vmatpush.msra.mxu0 %v341
    %1109 = vmatpush.msra.mxu0 %v337
    %1110 = vmatpush.msra.mxu0 %v333
    %1111 = vmatpush.msra.mxu0 %v329
    %1112 = vmatpush.msra.mxu0 %v325
    %1113 = vmatmul.f32.gmra.mxu0 %v1035
    %v1114 = vpop.f32.mrf.mxu0
    %v1115 = vadd.f32 0.0, %v1114
    %1116 = vdwg.mxu0
    %v1121 = vrot.slane %v1055, 4
    %v1122 = vrot.slane %v1075, 4
    %v1123 = vrot.slane %v1095, 4
    %v1124 = vrot.slane %v1115, 4
    %v1129 = vadd.f32 %v391, %v1121
    %v1130 = vadd.f32 %v392, %v1122
    %v1131 = vadd.f32 %v393, %v1123
    %v1132 = vadd.f32 %v394, %v1124
    %v1133 = vxor.u32 %v1129, 2147483648
    %v1134 = vxor.u32 %v1130, 2147483648
    %v1135 = vxor.u32 %v1131, 2147483648
    %v1136 = vmul.f32 %v1133, 1.442695
    %v1137 = vpow.pop %v1136
    %v1138 = vmul.f32 %v1134, 1.442695
    %v1139 = vpow.pop %v1138
    %v1140 = vmul.f32 %v1135, 1.442695
    %v1141 = vpow.pop %v1140
    %v1142 = vadd.f32 %v1137, 1.0
    %v1143 = vadd.f32 %v1139, 1.0
    %v1144 = vadd.f32 %v1141, 1.0
    %v1145 = vrcp.pop %v1142
    %v1146 = vmul.f32 %v1142, %v1145
    %v1147 = vsub.f32 1.0, %v1146
    %v1148 = vmul.f32 %v1145, %v1147
    %v1149 = vadd.f32 %v1145, %v1148
    %vm1150 = vweird.f32 %v1142
    %vm1151 = vweird.f32 %v1145
    %vm1152 = vmor %vm1150, %vm1151
    %v1153 = vsel %vm1152, %v1145, %v1149
    %v1154 = vand.u32 2147483647, %v1142
    %vm1155 = vcmp.eq.f32.partialorder %v1154, 8.507059e+37
    %v1156 = vand.u32 %v1142, 2147483648
    %v1157 = vor.u32 1.1754944e-38, %v1156
    %v1158 = vsel %vm1155, %v1157, %v1153
    %v1159 = vmul.f32 1.0, %v1158
    %v1160 = vrcp.pop %v1143
    %v1161 = vmul.f32 %v1143, %v1160
    %v1162 = vsub.f32 1.0, %v1161
    %v1163 = vmul.f32 %v1160, %v1162
    %v1164 = vadd.f32 %v1160, %v1163
    %vm1165 = vweird.f32 %v1143
    %vm1166 = vweird.f32 %v1160
    %vm1167 = vmor %vm1165, %vm1166
    %v1168 = vsel %vm1167, %v1160, %v1164
    %v1169 = vand.u32 2147483647, %v1143
    %vm1170 = vcmp.eq.f32.partialorder %v1169, 8.507059e+37
    %v1171 = vand.u32 %v1143, 2147483648
    %v1172 = vor.u32 1.1754944e-38, %v1171
    %v1173 = vsel %vm1170, %v1172, %v1168
    %v1174 = vmul.f32 1.0, %v1173
    %v1175 = vrcp.pop %v1144
    %v1176 = vmul.f32 %v1144, %v1175
    %v1177 = vsub.f32 1.0, %v1176
    %v1178 = vmul.f32 %v1175, %v1177
    %v1179 = vadd.f32 %v1175, %v1178
    %vm1180 = vweird.f32 %v1144
    %vm1181 = vweird.f32 %v1175
    %vm1182 = vmor %vm1180, %vm1181
    %v1183 = vsel %vm1182, %v1175, %v1179
    %v1184 = vand.u32 2147483647, %v1144
    %vm1185 = vcmp.eq.f32.partialorder %v1184, 8.507059e+37
    %v1186 = vand.u32 %v1144, 2147483648
    %v1187 = vor.u32 1.1754944e-38, %v1186
    %v1188 = vsel %vm1185, %v1187, %v1183
    %v1189 = vmul.f32 1.0, %v1188
    %v1190 = vtanh.pop %v1132
    %v1192 = vrot.slane %v1031, 7
    %v1194 = vmul.f32 %v1174, %v1192
    %v1195 = vmul.f32 %v1159, %v1190
    %v1196 = vadd.f32 %v1194, %v1195
    %v1197 = vtanh.pop %v1196
    %v1198 = vmul.f32 %v1189, %v1197
    %v1200 = vrot.slane %v1198, 4
    %1202 = vmatpush.msra.mxu0 %v382
    %1203 = vmatpush.msra.mxu0 %v378
    %1204 = vmatpush.msra.mxu0 %v374
    %1205 = vmatpush.msra.mxu0 %v370
    %1206 = vmatpush.msra.mxu0 %v366
    %1207 = vmatpush.msra.mxu0 %v362
    %1208 = vmatpush.msra.mxu0 %v358
    %1209 = vmatpush.msra.mxu0 %v354
    %1210 = vmatpush.msra.mxu0 %v350
    %1211 = vmatpush.msra.mxu0 %v346
    %1212 = vmatpush.msra.mxu0 %v342
    %1213 = vmatpush.msra.mxu0 %v338
    %1214 = vmatpush.msra.mxu0 %v334
    %1215 = vmatpush.msra.mxu0 %v330
    %1216 = vmatpush.msra.mxu0 %v326
    %1217 = vmatpush.msra.mxu0 %v322
    %1218 = vmatmul.f32.gmra.mxu0 %v1200
    %v1219 = vpop.f32.mrf.mxu0
    %v1220 = vadd.f32 0.0, %v1219
    %1221 = vdwg.mxu0
    %1222 = vmatpush.msra.mxu0 %v383
    %1223 = vmatpush.msra.mxu0 %v379
    %1224 = vmatpush.msra.mxu0 %v375
    %1225 = vmatpush.msra.mxu0 %v371
    %1226 = vmatpush.msra.mxu0 %v367
    %1227 = vmatpush.msra.mxu0 %v363
    %1228 = vmatpush.msra.mxu0 %v359
    %1229 = vmatpush.msra.mxu0 %v355
    %1230 = vmatpush.msra.mxu0 %v351
    %1231 = vmatpush.msra.mxu0 %v347
    %1232 = vmatpush.msra.mxu0 %v343
    %1233 = vmatpush.msra.mxu0 %v339
    %1234 = vmatpush.msra.mxu0 %v335
    %1235 = vmatpush.msra.mxu0 %v331
    %1236 = vmatpush.msra.mxu0 %v327
    %1237 = vmatpush.msra.mxu0 %v323
    %1238 = vmatmul.f32.gmra.mxu0 %v1200
    %v1239 = vpop.f32.mrf.mxu0
    %v1240 = vadd.f32 0.0, %v1239
    %1241 = vdwg.mxu0
    %1242 = vmatpush.msra.mxu0 %v384
    %1243 = vmatpush.msra.mxu0 %v380
    %1244 = vmatpush.msra.mxu0 %v376
    %1245 = vmatpush.msra.mxu0 %v372
    %1246 = vmatpush.msra.mxu0 %v368
    %1247 = vmatpush.msra.mxu0 %v364
    %1248 = vmatpush.msra.mxu0 %v360
    %1249 = vmatpush.msra.mxu0 %v356
    %1250 = vmatpush.msra.mxu0 %v352
    %1251 = vmatpush.msra.mxu0 %v348
    %1252 = vmatpush.msra.mxu0 %v344
    %1253 = vmatpush.msra.mxu0 %v340
    %1254 = vmatpush.msra.mxu0 %v336
    %1255 = vmatpush.msra.mxu0 %v332
    %1256 = vmatpush.msra.mxu0 %v328
    %1257 = vmatpush.msra.mxu0 %v324
    %1258 = vmatmul.f32.gmra.mxu0 %v1200
    %v1259 = vpop.f32.mrf.mxu0
    %v1260 = vadd.f32 0.0, %v1259
    %1261 = vdwg.mxu0
    %1262 = vmatpush.msra.mxu0 %v385
    %1263 = vmatpush.msra.mxu0 %v381
    %1264 = vmatpush.msra.mxu0 %v377
    %1265 = vmatpush.msra.mxu0 %v373
    %1266 = vmatpush.msra.mxu0 %v369
    %1267 = vmatpush.msra.mxu0 %v365
    %1268 = vmatpush.msra.mxu0 %v361
    %1269 = vmatpush.msra.mxu0 %v357
    %1270 = vmatpush.msra.mxu0 %v353
    %1271 = vmatpush.msra.mxu0 %v349
    %1272 = vmatpush.msra.mxu0 %v345
    %1273 = vmatpush.msra.mxu0 %v341
    %1274 = vmatpush.msra.mxu0 %v337
    %1275 = vmatpush.msra.mxu0 %v333
    %1276 = vmatpush.msra.mxu0 %v329
    %1277 = vmatpush.msra.mxu0 %v325
    %1278 = vmatmul.f32.gmra.mxu0 %v1200
    %v1279 = vpop.f32.mrf.mxu0
    %v1280 = vadd.f32 0.0, %v1279
    %1281 = vdwg.mxu0
    %v1286 = vrot.slane %v1220, 3
    %v1287 = vrot.slane %v1240, 3
    %v1288 = vrot.slane %v1260, 3
    %v1289 = vrot.slane %v1280, 3
    %v1294 = vadd.f32 %v391, %v1286
    %v1295 = vadd.f32 %v392, %v1287
    %v1296 = vadd.f32 %v393, %v1288
    %v1297 = vadd.f32 %v394, %v1289
    %v1298 = vxor.u32 %v1294, 2147483648
    %v1299 = vxor.u32 %v1295, 2147483648
    %v1300 = vxor.u32 %v1296, 2147483648
    %v1301 = vmul.f32 %v1298, 1.442695
    %v1302 = vpow.pop %v1301
    %v1303 = vmul.f32 %v1299, 1.442695
    %v1304 = vpow.pop %v1303
    %v1305 = vmul.f32 %v1300, 1.442695
    %v1306 = vpow.pop %v1305
    %v1307 = vadd.f32 %v1302, 1.0
    %v1308 = vadd.f32 %v1304, 1.0
    %v1309 = vadd.f32 %v1306, 1.0
    %v1310 = vrcp.pop %v1307
    %v1311 = vmul.f32 %v1307, %v1310
    %v1312 = vsub.f32 1.0, %v1311
    %v1313 = vmul.f32 %v1310, %v1312
    %v1314 = vadd.f32 %v1310, %v1313
    %vm1315 = vweird.f32 %v1307
    %vm1316 = vweird.f32 %v1310
    %vm1317 = vmor %vm1315, %vm1316
    %v1318 = vsel %vm1317, %v1310, %v1314
    %v1319 = vand.u32 2147483647, %v1307
    %vm1320 = vcmp.eq.f32.partialorder %v1319, 8.507059e+37
    %v1321 = vand.u32 %v1307, 2147483648
    %v1322 = vor.u32 1.1754944e-38, %v1321
    %v1323 = vsel %vm1320, %v1322, %v1318
    %v1324 = vmul.f32 1.0, %v1323
    %v1325 = vrcp.pop %v1308
    %v1326 = vmul.f32 %v1308, %v1325
    %v1327 = vsub.f32 1.0, %v1326
    %v1328 = vmul.f32 %v1325, %v1327
    %v1329 = vadd.f32 %v1325, %v1328
    %vm1330 = vweird.f32 %v1308
    %vm1331 = vweird.f32 %v1325
    %vm1332 = vmor %vm1330, %vm1331
    %v1333 = vsel %vm1332, %v1325, %v1329
    %v1334 = vand.u32 2147483647, %v1308
    %vm1335 = vcmp.eq.f32.partialorder %v1334, 8.507059e+37
    %v1336 = vand.u32 %v1308, 2147483648
    %v1337 = vor.u32 1.1754944e-38, %v1336
    %v1338 = vsel %vm1335, %v1337, %v1333
    %v1339 = vmul.f32 1.0, %v1338
    %v1340 = vrcp.pop %v1309
    %v1341 = vmul.f32 %v1309, %v1340
    %v1342 = vsub.f32 1.0, %v1341
    %v1343 = vmul.f32 %v1340, %v1342
    %v1344 = vadd.f32 %v1340, %v1343
    %vm1345 = vweird.f32 %v1309
    %vm1346 = vweird.f32 %v1340
    %vm1347 = vmor %vm1345, %vm1346
    %v1348 = vsel %vm1347, %v1340, %v1344
    %v1349 = vand.u32 2147483647, %v1309
    %vm1350 = vcmp.eq.f32.partialorder %v1349, 8.507059e+37
    %v1351 = vand.u32 %v1309, 2147483648
    %v1352 = vor.u32 1.1754944e-38, %v1351
    %v1353 = vsel %vm1350, %v1352, %v1348
    %v1354 = vmul.f32 1.0, %v1353
    %v1355 = vtanh.pop %v1297
    %v1357 = vrot.slane %v1196, 7
    %v1359 = vmul.f32 %v1339, %v1357
    %v1360 = vmul.f32 %v1324, %v1355
    %v1361 = vadd.f32 %v1359, %v1360
    %v1362 = vtanh.pop %v1361
    %v1363 = vmul.f32 %v1354, %v1362
    %v1365 = vrot.slane %v1363, 5
    %1367 = vmatpush.msra.mxu0 %v382
    %1368 = vmatpush.msra.mxu0 %v378
    %1369 = vmatpush.msra.mxu0 %v374
    %1370 = vmatpush.msra.mxu0 %v370
    %1371 = vmatpush.msra.mxu0 %v366
    %1372 = vmatpush.msra.mxu0 %v362
    %1373 = vmatpush.msra.mxu0 %v358
    %1374 = vmatpush.msra.mxu0 %v354
    %1375 = vmatpush.msra.mxu0 %v350
    %1376 = vmatpush.msra.mxu0 %v346
    %1377 = vmatpush.msra.mxu0 %v342
    %1378 = vmatpush.msra.mxu0 %v338
    %1379 = vmatpush.msra.mxu0 %v334
    %1380 = vmatpush.msra.mxu0 %v330
    %1381 = vmatpush.msra.mxu0 %v326
    %1382 = vmatpush.msra.mxu0 %v322
    %1383 = vmatmul.f32.gmra.mxu0 %v1365
    %v1384 = vpop.f32.mrf.mxu0
    %v1385 = vadd.f32 0.0, %v1384
    %1386 = vdwg.mxu0
    %1387 = vmatpush.msra.mxu0 %v383
    %1388 = vmatpush.msra.mxu0 %v379
    %1389 = vmatpush.msra.mxu0 %v375
    %1390 = vmatpush.msra.mxu0 %v371
    %1391 = vmatpush.msra.mxu0 %v367
    %1392 = vmatpush.msra.mxu0 %v363
    %1393 = vmatpush.msra.mxu0 %v359
    %1394 = vmatpush.msra.mxu0 %v355
    %1395 = vmatpush.msra.mxu0 %v351
    %1396 = vmatpush.msra.mxu0 %v347
    %1397 = vmatpush.msra.mxu0 %v343
    %1398 = vmatpush.msra.mxu0 %v339
    %1399 = vmatpush.msra.mxu0 %v335
    %1400 = vmatpush.msra.mxu0 %v331
    %1401 = vmatpush.msra.mxu0 %v327
    %1402 = vmatpush.msra.mxu0 %v323
    %1403 = vmatmul.f32.gmra.mxu0 %v1365
    %v1404 = vpop.f32.mrf.mxu0
    %v1405 = vadd.f32 0.0, %v1404
    %1406 = vdwg.mxu0
    %1407 = vmatpush.msra.mxu0 %v384
    %1408 = vmatpush.msra.mxu0 %v380
    %1409 = vmatpush.msra.mxu0 %v376
    %1410 = vmatpush.msra.mxu0 %v372
    %1411 = vmatpush.msra.mxu0 %v368
    %1412 = vmatpush.msra.mxu0 %v364
    %1413 = vmatpush.msra.mxu0 %v360
    %1414 = vmatpush.msra.mxu0 %v356
    %1415 = vmatpush.msra.mxu0 %v352
    %1416 = vmatpush.msra.mxu0 %v348
    %1417 = vmatpush.msra.mxu0 %v344
    %1418 = vmatpush.msra.mxu0 %v340
    %1419 = vmatpush.msra.mxu0 %v336
    %1420 = vmatpush.msra.mxu0 %v332
    %1421 = vmatpush.msra.mxu0 %v328
    %1422 = vmatpush.msra.mxu0 %v324
    %1423 = vmatmul.f32.gmra.mxu0 %v1365
    %v1424 = vpop.f32.mrf.mxu0
    %v1425 = vadd.f32 0.0, %v1424
    %1426 = vdwg.mxu0
    %1427 = vmatpush.msra.mxu0 %v385
    %1428 = vmatpush.msra.mxu0 %v381
    %1429 = vmatpush.msra.mxu0 %v377
    %1430 = vmatpush.msra.mxu0 %v373
    %1431 = vmatpush.msra.mxu0 %v369
    %1432 = vmatpush.msra.mxu0 %v365
    %1433 = vmatpush.msra.mxu0 %v361
    %1434 = vmatpush.msra.mxu0 %v357
    %1435 = vmatpush.msra.mxu0 %v353
    %1436 = vmatpush.msra.mxu0 %v349
    %1437 = vmatpush.msra.mxu0 %v345
    %1438 = vmatpush.msra.mxu0 %v341
    %1439 = vmatpush.msra.mxu0 %v337
    %1440 = vmatpush.msra.mxu0 %v333
    %1441 = vmatpush.msra.mxu0 %v329
    %1442 = vmatpush.msra.mxu0 %v325
    %1443 = vmatmul.f32.gmra.mxu0 %v1365
    %v1444 = vpop.f32.mrf.mxu0
    %v1445 = vadd.f32 0.0, %v1444
    %1446 = vdwg.mxu0
    %v1451 = vrot.slane %v1385, 2
    %v1452 = vrot.slane %v1405, 2
    %v1453 = vrot.slane %v1425, 2
    %v1454 = vrot.slane %v1445, 2
    %v1459 = vadd.f32 %v391, %v1451
    %v1460 = vadd.f32 %v392, %v1452
    %v1461 = vadd.f32 %v393, %v1453
    %v1462 = vadd.f32 %v394, %v1454
    %v1463 = vxor.u32 %v1459, 2147483648
    %v1464 = vxor.u32 %v1460, 2147483648
    %v1465 = vxor.u32 %v1461, 2147483648
    %v1466 = vmul.f32 %v1463, 1.442695
    %v1467 = vpow.pop %v1466
    %v1468 = vmul.f32 %v1464, 1.442695
    %v1469 = vpow.pop %v1468
    %v1470 = vmul.f32 %v1465, 1.442695
    %v1471 = vpow.pop %v1470
    %v1472 = vadd.f32 %v1467, 1.0
    %v1473 = vadd.f32 %v1469, 1.0
    %v1474 = vadd.f32 %v1471, 1.0
    %v1475 = vrcp.pop %v1472
    %v1476 = vmul.f32 %v1472, %v1475
    %v1477 = vsub.f32 1.0, %v1476
    %v1478 = vmul.f32 %v1475, %v1477
    %v1479 = vadd.f32 %v1475, %v1478
    %vm1480 = vweird.f32 %v1472
    %vm1481 = vweird.f32 %v1475
    %vm1482 = vmor %vm1480, %vm1481
    %v1483 = vsel %vm1482, %v1475, %v1479
    %v1484 = vand.u32 2147483647, %v1472
    %vm1485 = vcmp.eq.f32.partialorder %v1484, 8.507059e+37
    %v1486 = vand.u32 %v1472, 2147483648
    %v1487 = vor.u32 1.1754944e-38, %v1486
    %v1488 = vsel %vm1485, %v1487, %v1483
    %v1489 = vmul.f32 1.0, %v1488
    %v1490 = vrcp.pop %v1473
    %v1491 = vmul.f32 %v1473, %v1490
    %v1492 = vsub.f32 1.0, %v1491
    %v1493 = vmul.f32 %v1490, %v1492
    %v1494 = vadd.f32 %v1490, %v1493
    %vm1495 = vweird.f32 %v1473
    %vm1496 = vweird.f32 %v1490
    %vm1497 = vmor %vm1495, %vm1496
    %v1498 = vsel %vm1497, %v1490, %v1494
    %v1499 = vand.u32 2147483647, %v1473
    %vm1500 = vcmp.eq.f32.partialorder %v1499, 8.507059e+37
    %v1501 = vand.u32 %v1473, 2147483648
    %v1502 = vor.u32 1.1754944e-38, %v1501
    %v1503 = vsel %vm1500, %v1502, %v1498
    %v1504 = vmul.f32 1.0, %v1503
    %v1505 = vrcp.pop %v1474
    %v1506 = vmul.f32 %v1474, %v1505
    %v1507 = vsub.f32 1.0, %v1506
    %v1508 = vmul.f32 %v1505, %v1507
    %v1509 = vadd.f32 %v1505, %v1508
    %vm1510 = vweird.f32 %v1474
    %vm1511 = vweird.f32 %v1505
    %vm1512 = vmor %vm1510, %vm1511
    %v1513 = vsel %vm1512, %v1505, %v1509
    %v1514 = vand.u32 2147483647, %v1474
    %vm1515 = vcmp.eq.f32.partialorder %v1514, 8.507059e+37
    %v1516 = vand.u32 %v1474, 2147483648
    %v1517 = vor.u32 1.1754944e-38, %v1516
    %v1518 = vsel %vm1515, %v1517, %v1513
    %v1519 = vmul.f32 1.0, %v1518
    %v1520 = vtanh.pop %v1462
    %v1522 = vrot.slane %v1361, 7
    %v1524 = vmul.f32 %v1504, %v1522
    %v1525 = vmul.f32 %v1489, %v1520
    %v1526 = vadd.f32 %v1524, %v1525
    %v1527 = vtanh.pop %v1526
    %v1528 = vmul.f32 %v1519, %v1527
    %v1530 = vrot.slane %v1528, 6
    %1532 = vmatpush.msra.mxu0 %v382
    %1533 = vmatpush.msra.mxu0 %v378
    %1534 = vmatpush.msra.mxu0 %v374
    %1535 = vmatpush.msra.mxu0 %v370
    %1536 = vmatpush.msra.mxu0 %v366
    %1537 = vmatpush.msra.mxu0 %v362
    %1538 = vmatpush.msra.mxu0 %v358
    %1539 = vmatpush.msra.mxu0 %v354
    %1540 = vmatpush.msra.mxu0 %v350
    %1541 = vmatpush.msra.mxu0 %v346
    %1542 = vmatpush.msra.mxu0 %v342
    %1543 = vmatpush.msra.mxu0 %v338
    %1544 = vmatpush.msra.mxu0 %v334
    %1545 = vmatpush.msra.mxu0 %v330
    %1546 = vmatpush.msra.mxu0 %v326
    %1547 = vmatpush.msra.mxu0 %v322
    %1548 = vmatmul.f32.gmra.mxu0 %v1530
    %v1549 = vpop.f32.mrf.mxu0
    %v1550 = vadd.f32 0.0, %v1549
    %1551 = vdwg.mxu0
    %1552 = vmatpush.msra.mxu0 %v383
    %1553 = vmatpush.msra.mxu0 %v379
    %1554 = vmatpush.msra.mxu0 %v375
    %1555 = vmatpush.msra.mxu0 %v371
    %1556 = vmatpush.msra.mxu0 %v367
    %1557 = vmatpush.msra.mxu0 %v363
    %1558 = vmatpush.msra.mxu0 %v359
    %1559 = vmatpush.msra.mxu0 %v355
    %1560 = vmatpush.msra.mxu0 %v351
    %1561 = vmatpush.msra.mxu0 %v347
    %1562 = vmatpush.msra.mxu0 %v343
    %1563 = vmatpush.msra.mxu0 %v339
    %1564 = vmatpush.msra.mxu0 %v335
    %1565 = vmatpush.msra.mxu0 %v331
    %1566 = vmatpush.msra.mxu0 %v327
    %1567 = vmatpush.msra.mxu0 %v323
    %1568 = vmatmul.f32.gmra.mxu0 %v1530
    %v1569 = vpop.f32.mrf.mxu0
    %v1570 = vadd.f32 0.0, %v1569
    %1571 = vdwg.mxu0
    %1572 = vmatpush.msra.mxu0 %v384
    %1573 = vmatpush.msra.mxu0 %v380
    %1574 = vmatpush.msra.mxu0 %v376
    %1575 = vmatpush.msra.mxu0 %v372
    %1576 = vmatpush.msra.mxu0 %v368
    %1577 = vmatpush.msra.mxu0 %v364
    %1578 = vmatpush.msra.mxu0 %v360
    %1579 = vmatpush.msra.mxu0 %v356
    %1580 = vmatpush.msra.mxu0 %v352
    %1581 = vmatpush.msra.mxu0 %v348
    %1582 = vmatpush.msra.mxu0 %v344
    %1583 = vmatpush.msra.mxu0 %v340
    %1584 = vmatpush.msra.mxu0 %v336
    %1585 = vmatpush.msra.mxu0 %v332
    %1586 = vmatpush.msra.mxu0 %v328
    %1587 = vmatpush.msra.mxu0 %v324
    %1588 = vmatmul.f32.gmra.mxu0 %v1530
    %v1589 = vpop.f32.mrf.mxu0
    %v1590 = vadd.f32 0.0, %v1589
    %1591 = vdwg.mxu0
    %1592 = vmatpush.msra.mxu0 %v385
    %1593 = vmatpush.msra.mxu0 %v381
    %1594 = vmatpush.msra.mxu0 %v377
    %1595 = vmatpush.msra.mxu0 %v373
    %1596 = vmatpush.msra.mxu0 %v369
    %1597 = vmatpush.msra.mxu0 %v365
    %1598 = vmatpush.msra.mxu0 %v361
    %1599 = vmatpush.msra.mxu0 %v357
    %1600 = vmatpush.msra.mxu0 %v353
    %1601 = vmatpush.msra.mxu0 %v349
    %1602 = vmatpush.msra.mxu0 %v345
    %1603 = vmatpush.msra.mxu0 %v341
    %1604 = vmatpush.msra.mxu0 %v337
    %1605 = vmatpush.msra.mxu0 %v333
    %1606 = vmatpush.msra.mxu0 %v329
    %1607 = vmatpush.msra.mxu0 %v325
    %1608 = vmatmul.f32.gmra.mxu0 %v1530
    %v1609 = vpop.f32.mrf.mxu0
    %v1610 = vadd.f32 0.0, %v1609
    %1611 = vdwg.mxu0
    %v1616 = vrot.slane %v1550, 1
    %v1617 = vrot.slane %v1570, 1
    %v1618 = vrot.slane %v1590, 1
    %v1619 = vrot.slane %v1610, 1
    %v1624 = vadd.f32 %v391, %v1616
    %v1625 = vadd.f32 %v392, %v1617
    %v1626 = vadd.f32 %v393, %v1618
    %v1627 = vadd.f32 %v394, %v1619
    %v1628 = vxor.u32 %v1624, 2147483648
    %v1629 = vxor.u32 %v1625, 2147483648
    %v1630 = vxor.u32 %v1626, 2147483648
    %v1631 = vmul.f32 %v1628, 1.442695
    %v1632 = vpow.pop %v1631
    %v1633 = vmul.f32 %v1629, 1.442695
    %v1634 = vpow.pop %v1633
    %v1635 = vmul.f32 %v1630, 1.442695
    %v1636 = vpow.pop %v1635
    %v1637 = vadd.f32 %v1632, 1.0
    %v1638 = vadd.f32 %v1634, 1.0
    %v1639 = vadd.f32 %v1636, 1.0
    %v1640 = vrcp.pop %v1637
    %v1641 = vmul.f32 %v1637, %v1640
    %v1642 = vsub.f32 1.0, %v1641
    %v1643 = vmul.f32 %v1640, %v1642
    %v1644 = vadd.f32 %v1640, %v1643
    %vm1645 = vweird.f32 %v1637
    %vm1646 = vweird.f32 %v1640
    %vm1647 = vmor %vm1645, %vm1646
    %v1648 = vsel %vm1647, %v1640, %v1644
    %v1649 = vand.u32 2147483647, %v1637
    %vm1650 = vcmp.eq.f32.partialorder %v1649, 8.507059e+37
    %v1651 = vand.u32 %v1637, 2147483648
    %v1652 = vor.u32 1.1754944e-38, %v1651
    %v1653 = vsel %vm1650, %v1652, %v1648
    %v1654 = vmul.f32 1.0, %v1653
    %v1655 = vrcp.pop %v1638
    %v1656 = vmul.f32 %v1638, %v1655
    %v1657 = vsub.f32 1.0, %v1656
    %v1658 = vmul.f32 %v1655, %v1657
    %v1659 = vadd.f32 %v1655, %v1658
    %vm1660 = vweird.f32 %v1638
    %vm1661 = vweird.f32 %v1655
    %vm1662 = vmor %vm1660, %vm1661
    %v1663 = vsel %vm1662, %v1655, %v1659
    %v1664 = vand.u32 2147483647, %v1638
    %vm1665 = vcmp.eq.f32.partialorder %v1664, 8.507059e+37
    %v1666 = vand.u32 %v1638, 2147483648
    %v1667 = vor.u32 1.1754944e-38, %v1666
    %v1668 = vsel %vm1665, %v1667, %v1663
    %v1669 = vmul.f32 1.0, %v1668
    %v1670 = vrcp.pop %v1639
    %v1671 = vmul.f32 %v1639, %v1670
    %v1672 = vsub.f32 1.0, %v1671
    %v1673 = vmul.f32 %v1670, %v1672
    %v1674 = vadd.f32 %v1670, %v1673
    %vm1675 = vweird.f32 %v1639
    %vm1676 = vweird.f32 %v1670
    %vm1677 = vmor %vm1675, %vm1676
    %v1678 = vsel %vm1677, %v1670, %v1674
    %v1679 = vand.u32 2147483647, %v1639
    %vm1680 = vcmp.eq.f32.partialorder %v1679, 8.507059e+37
    %v1681 = vand.u32 %v1639, 2147483648
    %v1682 = vor.u32 1.1754944e-38, %v1681
    %v1683 = vsel %vm1680, %v1682, %v1678
    %v1684 = vmul.f32 1.0, %v1683
    %v1685 = vtanh.pop %v1627
    %v1687 = vrot.slane %v1526, 7
    %v1689 = vmul.f32 %v1669, %v1687
    %v1690 = vmul.f32 %v1654, %v1685
    %v1691 = vadd.f32 %v1689, %v1690
    %v1692 = vtanh.pop %v1691
    %v1693 = vmul.f32 %v1684, %v1692
    %vm1694 = vcmask 1040384
    %v1695 = vsel %vm1694, %v541, %v703
    %vm1696 = vcmask 1041408
    %v1697 = vsel %vm1696, %v1695, %v868
    %vm1698 = vcmask 1042432
    %v1699 = vsel %vm1698, %v1697, %v1033
    %vm1700 = vcmask 1043456
    %v1701 = vsel %vm1700, %v1699, %v1198
    %vm1702 = vcmask 1044480
    %v1703 = vsel %vm1702, %v1701, %v1363
    %vm1704 = vcmask 1045504
    %v1705 = vsel %vm1704, %v1703, %v1528
    %vm1706 = vcmask 1046528
    %v1707 = vsel %vm1706, %v1705, %v1693
    %1708 = vst [vmem:[#allocation12] sm:$0xff] %v1707
    %v1709 = vld [vmem:[#allocation5 + $0x20] sm:$0xf]
    %v1710 = vld [vmem:[#allocation5 + $0x28] sm:$0xf]
    %v1711 = vld [vmem:[#allocation5 + $0x30] sm:$0xf]
    %v1712 = vld [vmem:[#allocation5 + $0x38] sm:$0xf]
    %v1714 = vrot.slane %v1693, 7
    %1716 = vmatpush.msra.mxu0 %v382
    %1717 = vmatpush.msra.mxu0 %v378
    %1718 = vmatpush.msra.mxu0 %v374
    %1719 = vmatpush.msra.mxu0 %v370
    %1720 = vmatpush.msra.mxu0 %v366
    %1721 = vmatpush.msra.mxu0 %v362
    %1722 = vmatpush.msra.mxu0 %v358
    %1723 = vmatpush.msra.mxu0 %v354
    %1724 = vmatpush.msra.mxu0 %v350
    %1725 = vmatpush.msra.mxu0 %v346
    %1726 = vmatpush.msra.mxu0 %v342
    %1727 = vmatpush.msra.mxu0 %v338
    %1728 = vmatpush.msra.mxu0 %v334
    %1729 = vmatpush.msra.mxu0 %v330
    %1730 = vmatpush.msra.mxu0 %v326
    %1731 = vmatpush.msra.mxu0 %v322
    %1732 = vmatmul.f32.gmra.mxu0 %v1714
    %v1733 = vpop.f32.mrf.mxu0
    %v1734 = vadd.f32 0.0, %v1733
    %1735 = vdwg.mxu0
    %1736 = vmatpush.msra.mxu0 %v383
    %1737 = vmatpush.msra.mxu0 %v379
    %1738 = vmatpush.msra.mxu0 %v375
    %1739 = vmatpush.msra.mxu0 %v371
    %1740 = vmatpush.msra.mxu0 %v367
    %1741 = vmatpush.msra.mxu0 %v363
    %1742 = vmatpush.msra.mxu0 %v359
    %1743 = vmatpush.msra.mxu0 %v355
    %1744 = vmatpush.msra.mxu0 %v351
    %1745 = vmatpush.msra.mxu0 %v347
    %1746 = vmatpush.msra.mxu0 %v343
    %1747 = vmatpush.msra.mxu0 %v339
    %1748 = vmatpush.msra.mxu0 %v335
    %1749 = vmatpush.msra.mxu0 %v331
    %1750 = vmatpush.msra.mxu0 %v327
    %1751 = vmatpush.msra.mxu0 %v323
    %1752 = vmatmul.f32.gmra.mxu0 %v1714
    %v1753 = vpop.f32.mrf.mxu0
    %v1754 = vadd.f32 0.0, %v1753
    %1755 = vdwg.mxu0
    %1756 = vmatpush.msra.mxu0 %v384
    %1757 = vmatpush.msra.mxu0 %v380
    %1758 = vmatpush.msra.mxu0 %v376
    %1759 = vmatpush.msra.mxu0 %v372
    %1760 = vmatpush.msra.mxu0 %v368
    %1761 = vmatpush.msra.mxu0 %v364
    %1762 = vmatpush.msra.mxu0 %v360
    %1763 = vmatpush.msra.mxu0 %v356
    %1764 = vmatpush.msra.mxu0 %v352
    %1765 = vmatpush.msra.mxu0 %v348
    %1766 = vmatpush.msra.mxu0 %v344
    %1767 = vmatpush.msra.mxu0 %v340
    %1768 = vmatpush.msra.mxu0 %v336
    %1769 = vmatpush.msra.mxu0 %v332
    %1770 = vmatpush.msra.mxu0 %v328
    %1771 = vmatpush.msra.mxu0 %v324
    %1772 = vmatmul.f32.gmra.mxu0 %v1714
    %v1773 = vpop.f32.mrf.mxu0
    %v1774 = vadd.f32 0.0, %v1773
    %1775 = vdwg.mxu0
    %1776 = vmatpush.msra.mxu0 %v385
    %1777 = vmatpush.msra.mxu0 %v381
    %1778 = vmatpush.msra.mxu0 %v377
    %1779 = vmatpush.msra.mxu0 %v373
    %1780 = vmatpush.msra.mxu0 %v369
    %1781 = vmatpush.msra.mxu0 %v365
    %1782 = vmatpush.msra.mxu0 %v361
    %1783 = vmatpush.msra.mxu0 %v357
    %1784 = vmatpush.msra.mxu0 %v353
    %1785 = vmatpush.msra.mxu0 %v349
    %1786 = vmatpush.msra.mxu0 %v345
    %1787 = vmatpush.msra.mxu0 %v341
    %1788 = vmatpush.msra.mxu0 %v337
    %1789 = vmatpush.msra.mxu0 %v333
    %1790 = vmatpush.msra.mxu0 %v329
    %1791 = vmatpush.msra.mxu0 %v325
    %1792 = vmatmul.f32.gmra.mxu0 %v1714
    %v1793 = vpop.f32.mrf.mxu0
    %v1794 = vadd.f32 0.0, %v1793
    %1795 = vdwg.mxu0
    %v1796 = vadd.f32 %v1709, %v1734
    %v1797 = vadd.f32 %v1710, %v1754
    %v1798 = vadd.f32 %v1711, %v1774
    %v1799 = vadd.f32 %v1712, %v1794
    %v1800 = vxor.u32 %v1796, 2147483648
    %v1801 = vxor.u32 %v1797, 2147483648
    %v1802 = vxor.u32 %v1798, 2147483648
    %v1803 = vmul.f32 %v1800, 1.442695
    %v1804 = vpow.pop %v1803
    %v1805 = vmul.f32 %v1801, 1.442695
    %v1806 = vpow.pop %v1805
    %v1807 = vmul.f32 %v1802, 1.442695
    %v1808 = vpow.pop %v1807
    %v1809 = vadd.f32 %v1804, 1.0
    %v1810 = vadd.f32 %v1806, 1.0
    %v1811 = vadd.f32 %v1808, 1.0
    %v1812 = vrcp.pop %v1809
    %v1813 = vmul.f32 %v1809, %v1812
    %v1814 = vsub.f32 1.0, %v1813
    %v1815 = vmul.f32 %v1812, %v1814
    %v1816 = vadd.f32 %v1812, %v1815
    %vm1817 = vweird.f32 %v1809
    %vm1818 = vweird.f32 %v1812
    %vm1819 = vmor %vm1817, %vm1818
    %v1820 = vsel %vm1819, %v1812, %v1816
    %v1821 = vand.u32 2147483647, %v1809
    %vm1822 = vcmp.eq.f32.partialorder %v1821, 8.507059e+37
    %v1823 = vand.u32 %v1809, 2147483648
    %v1824 = vor.u32 1.1754944e-38, %v1823
    %v1825 = vsel %vm1822, %v1824, %v1820
    %v1826 = vmul.f32 1.0, %v1825
    %v1827 = vrcp.pop %v1810
    %v1828 = vmul.f32 %v1810, %v1827
    %v1829 = vsub.f32 1.0, %v1828
    %v1830 = vmul.f32 %v1827, %v1829
    %v1831 = vadd.f32 %v1827, %v1830
    %vm1832 = vweird.f32 %v1810
    %vm1833 = vweird.f32 %v1827
    %vm1834 = vmor %vm1832, %vm1833
    %v1835 = vsel %vm1834, %v1827, %v1831
    %v1836 = vand.u32 2147483647, %v1810
    %vm1837 = vcmp.eq.f32.partialorder %v1836, 8.507059e+37
    %v1838 = vand.u32 %v1810, 2147483648
    %v1839 = vor.u32 1.1754944e-38, %v1838
    %v1840 = vsel %vm1837, %v1839, %v1835
    %v1841 = vmul.f32 1.0, %v1840
    %v1842 = vrcp.pop %v1811
    %v1843 = vmul.f32 %v1811, %v1842
    %v1844 = vsub.f32 1.0, %v1843
    %v1845 = vmul.f32 %v1842, %v1844
    %v1846 = vadd.f32 %v1842, %v1845
    %vm1847 = vweird.f32 %v1811
    %vm1848 = vweird.f32 %v1842
    %vm1849 = vmor %vm1847, %vm1848
    %v1850 = vsel %vm1849, %v1842, %v1846
    %v1851 = vand.u32 2147483647, %v1811
    %vm1852 = vcmp.eq.f32.partialorder %v1851, 8.507059e+37
    %v1853 = vand.u32 %v1811, 2147483648
    %v1854 = vor.u32 1.1754944e-38, %v1853
    %v1855 = vsel %vm1852, %v1854, %v1850
    %v1856 = vmul.f32 1.0, %v1855
    %v1857 = vtanh.pop %v1799
    %v1859 = vrot.slane %v1691, 7
    %v1861 = vmul.f32 %v1841, %v1859
    %v1862 = vmul.f32 %v1826, %v1857
    %v1863 = vadd.f32 %v1861, %v1862
    %v1864 = vtanh.pop %v1863
    %v1865 = vmul.f32 %v1856, %v1864
    %1866 = vmatpush.msra.mxu0 %v382
    %1867 = vmatpush.msra.mxu0 %v378
    %1868 = vmatpush.msra.mxu0 %v374
    %1869 = vmatpush.msra.mxu0 %v370
    %1870 = vmatpush.msra.mxu0 %v366
    %1871 = vmatpush.msra.mxu0 %v362
    %1872 = vmatpush.msra.mxu0 %v358
    %1873 = vmatpush.msra.mxu0 %v354
    %1874 = vmatpush.msra.mxu0 %v350
    %1875 = vmatpush.msra.mxu0 %v346
    %1876 = vmatpush.msra.mxu0 %v342
    %1877 = vmatpush.msra.mxu0 %v338
    %1878 = vmatpush.msra.mxu0 %v334
    %1879 = vmatpush.msra.mxu0 %v330
    %1880 = vmatpush.msra.mxu0 %v326
    %1881 = vmatpush.msra.mxu0 %v322
    %1882 = vmatmul.f32.gmra.mxu0 %v1865
    %v1883 = vpop.f32.mrf.mxu0
    %v1884 = vadd.f32 0.0, %v1883
    %1885 = vdwg.mxu0
    %1886 = vmatpush.msra.mxu0 %v383
    %1887 = vmatpush.msra.mxu0 %v379
    %1888 = vmatpush.msra.mxu0 %v375
    %1889 = vmatpush.msra.mxu0 %v371
    %1890 = vmatpush.msra.mxu0 %v367
    %1891 = vmatpush.msra.mxu0 %v363
    %1892 = vmatpush.msra.mxu0 %v359
    %1893 = vmatpush.msra.mxu0 %v355
    %1894 = vmatpush.msra.mxu0 %v351
    %1895 = vmatpush.msra.mxu0 %v347
    %1896 = vmatpush.msra.mxu0 %v343
    %1897 = vmatpush.msra.mxu0 %v339
    %1898 = vmatpush.msra.mxu0 %v335
    %1899 = vmatpush.msra.mxu0 %v331
    %1900 = vmatpush.msra.mxu0 %v327
    %1901 = vmatpush.msra.mxu0 %v323
    %1902 = vmatmul.f32.gmra.mxu0 %v1865
    %v1903 = vpop.f32.mrf.mxu0
    %v1904 = vadd.f32 0.0, %v1903
    %1905 = vdwg.mxu0
    %1906 = vmatpush.msra.mxu0 %v384
    %1907 = vmatpush.msra.mxu0 %v380
    %1908 = vmatpush.msra.mxu0 %v376
    %1909 = vmatpush.msra.mxu0 %v372
    %1910 = vmatpush.msra.mxu0 %v368
    %1911 = vmatpush.msra.mxu0 %v364
    %1912 = vmatpush.msra.mxu0 %v360
    %1913 = vmatpush.msra.mxu0 %v356
    %1914 = vmatpush.msra.mxu0 %v352
    %1915 = vmatpush.msra.mxu0 %v348
    %1916 = vmatpush.msra.mxu0 %v344
    %1917 = vmatpush.msra.mxu0 %v340
    %1918 = vmatpush.msra.mxu0 %v336
    %1919 = vmatpush.msra.mxu0 %v332
    %1920 = vmatpush.msra.mxu0 %v328
    %1921 = vmatpush.msra.mxu0 %v324
    %1922 = vmatmul.f32.gmra.mxu0 %v1865
    %v1923 = vpop.f32.mrf.mxu0
    %v1924 = vadd.f32 0.0, %v1923
    %1925 = vdwg.mxu0
    %1926 = vmatpush.msra.mxu0 %v385
    %1927 = vmatpush.msra.mxu0 %v381
    %1928 = vmatpush.msra.mxu0 %v377
    %1929 = vmatpush.msra.mxu0 %v373
    %1930 = vmatpush.msra.mxu0 %v369
    %1931 = vmatpush.msra.mxu0 %v365
    %1932 = vmatpush.msra.mxu0 %v361
    %1933 = vmatpush.msra.mxu0 %v357
    %1934 = vmatpush.msra.mxu0 %v353
    %1935 = vmatpush.msra.mxu0 %v349
    %1936 = vmatpush.msra.mxu0 %v345
    %1937 = vmatpush.msra.mxu0 %v341
    %1938 = vmatpush.msra.mxu0 %v337
    %1939 = vmatpush.msra.mxu0 %v333
    %1940 = vmatpush.msra.mxu0 %v329
    %1941 = vmatpush.msra.mxu0 %v325
    %1942 = vmatmul.f32.gmra.mxu0 %v1865
    %v1943 = vpop.f32.mrf.mxu0
    %v1944 = vadd.f32 0.0, %v1943
    %1945 = vdwg.mxu0
    %v1950 = vrot.slane %v1884, 7
    %v1951 = vrot.slane %v1904, 7
    %v1952 = vrot.slane %v1924, 7
    %v1953 = vrot.slane %v1944, 7
    %v1958 = vadd.f32 %v1709, %v1950
    %v1959 = vadd.f32 %v1710, %v1951
    %v1960 = vadd.f32 %v1711, %v1952
    %v1961 = vadd.f32 %v1712, %v1953
    %v1962 = vxor.u32 %v1958, 2147483648
    %v1963 = vxor.u32 %v1959, 2147483648
    %v1964 = vxor.u32 %v1960, 2147483648
    %v1965 = vmul.f32 %v1962, 1.442695
    %v1966 = vpow.pop %v1965
    %v1967 = vmul.f32 %v1963, 1.442695
    %v1968 = vpow.pop %v1967
    %v1969 = vmul.f32 %v1964, 1.442695
    %v1970 = vpow.pop %v1969
    %v1971 = vadd.f32 %v1966, 1.0
    %v1972 = vadd.f32 %v1968, 1.0
    %v1973 = vadd.f32 %v1970, 1.0
    %v1974 = vrcp.pop %v1971
    %v1975 = vmul.f32 %v1971, %v1974
    %v1976 = vsub.f32 1.0, %v1975
    %v1977 = vmul.f32 %v1974, %v1976
    %v1978 = vadd.f32 %v1974, %v1977
    %vm1979 = vweird.f32 %v1971
    %vm1980 = vweird.f32 %v1974
    %vm1981 = vmor %vm1979, %vm1980
    %v1982 = vsel %vm1981, %v1974, %v1978
    %v1983 = vand.u32 2147483647, %v1971
    %vm1984 = vcmp.eq.f32.partialorder %v1983, 8.507059e+37
    %v1985 = vand.u32 %v1971, 2147483648
    %v1986 = vor.u32 1.1754944e-38, %v1985
    %v1987 = vsel %vm1984, %v1986, %v1982
    %v1988 = vmul.f32 1.0, %v1987
    %v1989 = vrcp.pop %v1972
    %v1990 = vmul.f32 %v1972, %v1989
    %v1991 = vsub.f32 1.0, %v1990
    %v1992 = vmul.f32 %v1989, %v1991
    %v1993 = vadd.f32 %v1989, %v1992
    %vm1994 = vweird.f32 %v1972
    %vm1995 = vweird.f32 %v1989
    %vm1996 = vmor %vm1994, %vm1995
    %v1997 = vsel %vm1996, %v1989, %v1993
    %v1998 = vand.u32 2147483647, %v1972
    %vm1999 = vcmp.eq.f32.partialorder %v1998, 8.507059e+37
    %v2000 = vand.u32 %v1972, 2147483648
    %v2001 = vor.u32 1.1754944e-38, %v2000
    %v2002 = vsel %vm1999, %v2001, %v1997
    %v2003 = vmul.f32 1.0, %v2002
    %v2004 = vrcp.pop %v1973
    %v2005 = vmul.f32 %v1973, %v2004
    %v2006 = vsub.f32 1.0, %v2005
    %v2007 = vmul.f32 %v2004, %v2006
    %v2008 = vadd.f32 %v2004, %v2007
    %vm2009 = vweird.f32 %v1973
    %vm2010 = vweird.f32 %v2004
    %vm2011 = vmor %vm2009, %vm2010
    %v2012 = vsel %vm2011, %v2004, %v2008
    %v2013 = vand.u32 2147483647, %v1973
    %vm2014 = vcmp.eq.f32.partialorder %v2013, 8.507059e+37
    %v2015 = vand.u32 %v1973, 2147483648
    %v2016 = vor.u32 1.1754944e-38, %v2015
    %v2017 = vsel %vm2014, %v2016, %v2012
    %v2018 = vmul.f32 1.0, %v2017
    %v2019 = vtanh.pop %v1961
    %v2021 = vrot.slane %v1863, 7
    %v2023 = vmul.f32 %v2003, %v2021
    %v2024 = vmul.f32 %v1988, %v2019
    %v2025 = vadd.f32 %v2023, %v2024
    %v2026 = vtanh.pop %v2025
    %v2027 = vmul.f32 %v2018, %v2026
    %v2029 = vrot.slane %v2027, 1
    %2031 = vmatpush.msra.mxu0 %v382
    %2032 = vmatpush.msra.mxu0 %v378
    %2033 = vmatpush.msra.mxu0 %v374
    %2034 = vmatpush.msra.mxu0 %v370
    %2035 = vmatpush.msra.mxu0 %v366
    %2036 = vmatpush.msra.mxu0 %v362
    %2037 = vmatpush.msra.mxu0 %v358
    %2038 = vmatpush.msra.mxu0 %v354
    %2039 = vmatpush.msra.mxu0 %v350
    %2040 = vmatpush.msra.mxu0 %v346
    %2041 = vmatpush.msra.mxu0 %v342
    %2042 = vmatpush.msra.mxu0 %v338
    %2043 = vmatpush.msra.mxu0 %v334
    %2044 = vmatpush.msra.mxu0 %v330
    %2045 = vmatpush.msra.mxu0 %v326
    %2046 = vmatpush.msra.mxu0 %v322
    %2047 = vmatmul.f32.gmra.mxu0 %v2029
    %v2048 = vpop.f32.mrf.mxu0
    %v2049 = vadd.f32 0.0, %v2048
    %2050 = vdwg.mxu0
    %2051 = vmatpush.msra.mxu0 %v383
    %2052 = vmatpush.msra.mxu0 %v379
    %2053 = vmatpush.msra.mxu0 %v375
    %2054 = vmatpush.msra.mxu0 %v371
    %2055 = vmatpush.msra.mxu0 %v367
    %2056 = vmatpush.msra.mxu0 %v363
    %2057 = vmatpush.msra.mxu0 %v359
    %2058 = vmatpush.msra.mxu0 %v355
    %2059 = vmatpush.msra.mxu0 %v351
    %2060 = vmatpush.msra.mxu0 %v347
    %2061 = vmatpush.msra.mxu0 %v343
    %2062 = vmatpush.msra.mxu0 %v339
    %2063 = vmatpush.msra.mxu0 %v335
    %2064 = vmatpush.msra.mxu0 %v331
    %2065 = vmatpush.msra.mxu0 %v327
    %2066 = vmatpush.msra.mxu0 %v323
    %2067 = vmatmul.f32.gmra.mxu0 %v2029
    %v2068 = vpop.f32.mrf.mxu0
    %v2069 = vadd.f32 0.0, %v2068
    %2070 = vdwg.mxu0
    %2071 = vmatpush.msra.mxu0 %v384
    %2072 = vmatpush.msra.mxu0 %v380
    %2073 = vmatpush.msra.mxu0 %v376
    %2074 = vmatpush.msra.mxu0 %v372
    %2075 = vmatpush.msra.mxu0 %v368
    %2076 = vmatpush.msra.mxu0 %v364
    %2077 = vmatpush.msra.mxu0 %v360
    %2078 = vmatpush.msra.mxu0 %v356
    %2079 = vmatpush.msra.mxu0 %v352
    %2080 = vmatpush.msra.mxu0 %v348
    %2081 = vmatpush.msra.mxu0 %v344
    %2082 = vmatpush.msra.mxu0 %v340
    %2083 = vmatpush.msra.mxu0 %v336
    %2084 = vmatpush.msra.mxu0 %v332
    %2085 = vmatpush.msra.mxu0 %v328
    %2086 = vmatpush.msra.mxu0 %v324
    %2087 = vmatmul.f32.gmra.mxu0 %v2029
    %v2088 = vpop.f32.mrf.mxu0
    %v2089 = vadd.f32 0.0, %v2088
    %2090 = vdwg.mxu0
    %2091 = vmatpush.msra.mxu0 %v385
    %2092 = vmatpush.msra.mxu0 %v381
    %2093 = vmatpush.msra.mxu0 %v377
    %2094 = vmatpush.msra.mxu0 %v373
    %2095 = vmatpush.msra.mxu0 %v369
    %2096 = vmatpush.msra.mxu0 %v365
    %2097 = vmatpush.msra.mxu0 %v361
    %2098 = vmatpush.msra.mxu0 %v357
    %2099 = vmatpush.msra.mxu0 %v353
    %2100 = vmatpush.msra.mxu0 %v349
    %2101 = vmatpush.msra.mxu0 %v345
    %2102 = vmatpush.msra.mxu0 %v341
    %2103 = vmatpush.msra.mxu0 %v337
    %2104 = vmatpush.msra.mxu0 %v333
    %2105 = vmatpush.msra.mxu0 %v329
    %2106 = vmatpush.msra.mxu0 %v325
    %2107 = vmatmul.f32.gmra.mxu0 %v2029
    %v2108 = vpop.f32.mrf.mxu0
    %v2109 = vadd.f32 0.0, %v2108
    %2110 = vdwg.mxu0
    %v2115 = vrot.slane %v2049, 6
    %v2116 = vrot.slane %v2069, 6
    %v2117 = vrot.slane %v2089, 6
    %v2118 = vrot.slane %v2109, 6
    %v2123 = vadd.f32 %v1709, %v2115
    %v2124 = vadd.f32 %v1710, %v2116
    %v2125 = vadd.f32 %v1711, %v2117
    %v2126 = vadd.f32 %v1712, %v2118
    %v2127 = vxor.u32 %v2123, 2147483648
    %v2128 = vxor.u32 %v2124, 2147483648
    %v2129 = vxor.u32 %v2125, 2147483648
    %v2130 = vmul.f32 %v2127, 1.442695
    %v2131 = vpow.pop %v2130
    %v2132 = vmul.f32 %v2128, 1.442695
    %v2133 = vpow.pop %v2132
    %v2134 = vmul.f32 %v2129, 1.442695
    %v2135 = vpow.pop %v2134
    %v2136 = vadd.f32 %v2131, 1.0
    %v2137 = vadd.f32 %v2133, 1.0
    %v2138 = vadd.f32 %v2135, 1.0
    %v2139 = vrcp.pop %v2136
    %v2140 = vmul.f32 %v2136, %v2139
    %v2141 = vsub.f32 1.0, %v2140
    %v2142 = vmul.f32 %v2139, %v2141
    %v2143 = vadd.f32 %v2139, %v2142
    %vm2144 = vweird.f32 %v2136
    %vm2145 = vweird.f32 %v2139
    %vm2146 = vmor %vm2144, %vm2145
    %v2147 = vsel %vm2146, %v2139, %v2143
    %v2148 = vand.u32 2147483647, %v2136
    %vm2149 = vcmp.eq.f32.partialorder %v2148, 8.507059e+37
    %v2150 = vand.u32 %v2136, 2147483648
    %v2151 = vor.u32 1.1754944e-38, %v2150
    %v2152 = vsel %vm2149, %v2151, %v2147
    %v2153 = vmul.f32 1.0, %v2152
    %v2154 = vrcp.pop %v2137
    %v2155 = vmul.f32 %v2137, %v2154
    %v2156 = vsub.f32 1.0, %v2155
    %v2157 = vmul.f32 %v2154, %v2156
    %v2158 = vadd.f32 %v2154, %v2157
    %vm2159 = vweird.f32 %v2137
    %vm2160 = vweird.f32 %v2154
    %vm2161 = vmor %vm2159, %vm2160
    %v2162 = vsel %vm2161, %v2154, %v2158
    %v2163 = vand.u32 2147483647, %v2137
    %vm2164 = vcmp.eq.f32.partialorder %v2163, 8.507059e+37
    %v2165 = vand.u32 %v2137, 2147483648
    %v2166 = vor.u32 1.1754944e-38, %v2165
    %v2167 = vsel %vm2164, %v2166, %v2162
    %v2168 = vmul.f32 1.0, %v2167
    %v2169 = vrcp.pop %v2138
    %v2170 = vmul.f32 %v2138, %v2169
    %v2171 = vsub.f32 1.0, %v2170
    %v2172 = vmul.f32 %v2169, %v2171
    %v2173 = vadd.f32 %v2169, %v2172
    %vm2174 = vweird.f32 %v2138
    %vm2175 = vweird.f32 %v2169
    %vm2176 = vmor %vm2174, %vm2175
    %v2177 = vsel %vm2176, %v2169, %v2173
    %v2178 = vand.u32 2147483647, %v2138
    %vm2179 = vcmp.eq.f32.partialorder %v2178, 8.507059e+37
    %v2180 = vand.u32 %v2138, 2147483648
    %v2181 = vor.u32 1.1754944e-38, %v2180
    %v2182 = vsel %vm2179, %v2181, %v2177
    %v2183 = vmul.f32 1.0, %v2182
    %v2184 = vtanh.pop %v2126
    %v2186 = vrot.slane %v2025, 7
    %v2188 = vmul.f32 %v2168, %v2186
    %v2189 = vmul.f32 %v2153, %v2184
    %v2190 = vadd.f32 %v2188, %v2189
    %v2191 = vtanh.pop %v2190
    %v2192 = vmul.f32 %v2183, %v2191
    %v2194 = vrot.slane %v2192, 2
    %2196 = vmatpush.msra.mxu0 %v382
    %2197 = vmatpush.msra.mxu0 %v378
    %2198 = vmatpush.msra.mxu0 %v374
    %2199 = vmatpush.msra.mxu0 %v370
    %2200 = vmatpush.msra.mxu0 %v366
    %2201 = vmatpush.msra.mxu0 %v362
    %2202 = vmatpush.msra.mxu0 %v358
    %2203 = vmatpush.msra.mxu0 %v354
    %2204 = vmatpush.msra.mxu0 %v350
    %2205 = vmatpush.msra.mxu0 %v346
    %2206 = vmatpush.msra.mxu0 %v342
    %2207 = vmatpush.msra.mxu0 %v338
    %2208 = vmatpush.msra.mxu0 %v334
    %2209 = vmatpush.msra.mxu0 %v330
    %2210 = vmatpush.msra.mxu0 %v326
    %2211 = vmatpush.msra.mxu0 %v322
    %2212 = vmatmul.f32.gmra.mxu0 %v2194
    %v2213 = vpop.f32.mrf.mxu0
    %v2214 = vadd.f32 0.0, %v2213
    %2215 = vdwg.mxu0
    %2216 = vmatpush.msra.mxu0 %v383
    %2217 = vmatpush.msra.mxu0 %v379
    %2218 = vmatpush.msra.mxu0 %v375
    %2219 = vmatpush.msra.mxu0 %v371
    %2220 = vmatpush.msra.mxu0 %v367
    %2221 = vmatpush.msra.mxu0 %v363
    %2222 = vmatpush.msra.mxu0 %v359
    %2223 = vmatpush.msra.mxu0 %v355
    %2224 = vmatpush.msra.mxu0 %v351
    %2225 = vmatpush.msra.mxu0 %v347
    %2226 = vmatpush.msra.mxu0 %v343
    %2227 = vmatpush.msra.mxu0 %v339
    %2228 = vmatpush.msra.mxu0 %v335
    %2229 = vmatpush.msra.mxu0 %v331
    %2230 = vmatpush.msra.mxu0 %v327
    %2231 = vmatpush.msra.mxu0 %v323
    %2232 = vmatmul.f32.gmra.mxu0 %v2194
    %v2233 = vpop.f32.mrf.mxu0
    %v2234 = vadd.f32 0.0, %v2233
    %2235 = vdwg.mxu0
    %2236 = vmatpush.msra.mxu0 %v384
    %2237 = vmatpush.msra.mxu0 %v380
    %2238 = vmatpush.msra.mxu0 %v376
    %2239 = vmatpush.msra.mxu0 %v372
    %2240 = vmatpush.msra.mxu0 %v368
    %2241 = vmatpush.msra.mxu0 %v364
    %2242 = vmatpush.msra.mxu0 %v360
    %2243 = vmatpush.msra.mxu0 %v356
    %2244 = vmatpush.msra.mxu0 %v352
    %2245 = vmatpush.msra.mxu0 %v348
    %2246 = vmatpush.msra.mxu0 %v344
    %2247 = vmatpush.msra.mxu0 %v340
    %2248 = vmatpush.msra.mxu0 %v336
    %2249 = vmatpush.msra.mxu0 %v332
    %2250 = vmatpush.msra.mxu0 %v328
    %2251 = vmatpush.msra.mxu0 %v324
    %2252 = vmatmul.f32.gmra.mxu0 %v2194
    %v2253 = vpop.f32.mrf.mxu0
    %v2254 = vadd.f32 0.0, %v2253
    %2255 = vdwg.mxu0
    %2256 = vmatpush.msra.mxu0 %v385
    %2257 = vmatpush.msra.mxu0 %v381
    %2258 = vmatpush.msra.mxu0 %v377
    %2259 = vmatpush.msra.mxu0 %v373
    %2260 = vmatpush.msra.mxu0 %v369
    %2261 = vmatpush.msra.mxu0 %v365
    %2262 = vmatpush.msra.mxu0 %v361
    %2263 = vmatpush.msra.mxu0 %v357
    %2264 = vmatpush.msra.mxu0 %v353
    %2265 = vmatpush.msra.mxu0 %v349
    %2266 = vmatpush.msra.mxu0 %v345
    %2267 = vmatpush.msra.mxu0 %v341
    %2268 = vmatpush.msra.mxu0 %v337
    %2269 = vmatpush.msra.mxu0 %v333
    %2270 = vmatpush.msra.mxu0 %v329
    %2271 = vmatpush.msra.mxu0 %v325
    %2272 = vmatmul.f32.gmra.mxu0 %v2194
    %v2273 = vpop.f32.mrf.mxu0
    %v2274 = vadd.f32 0.0, %v2273
    %2275 = vdwg.mxu0
    %v2280 = vrot.slane %v2214, 5
    %v2281 = vrot.slane %v2234, 5
    %v2282 = vrot.slane %v2254, 5
    %v2283 = vrot.slane %v2274, 5
    %v2288 = vadd.f32 %v1709, %v2280
    %v2289 = vadd.f32 %v1710, %v2281
    %v2290 = vadd.f32 %v1711, %v2282
    %v2291 = vadd.f32 %v1712, %v2283
    %v2292 = vxor.u32 %v2288, 2147483648
    %v2293 = vxor.u32 %v2289, 2147483648
    %v2294 = vxor.u32 %v2290, 2147483648
    %v2295 = vmul.f32 %v2292, 1.442695
    %v2296 = vpow.pop %v2295
    %v2297 = vmul.f32 %v2293, 1.442695
    %v2298 = vpow.pop %v2297
    %v2299 = vmul.f32 %v2294, 1.442695
    %v2300 = vpow.pop %v2299
    %v2301 = vadd.f32 %v2296, 1.0
    %v2302 = vadd.f32 %v2298, 1.0
    %v2303 = vadd.f32 %v2300, 1.0
    %v2304 = vrcp.pop %v2301
    %v2305 = vmul.f32 %v2301, %v2304
    %v2306 = vsub.f32 1.0, %v2305
    %v2307 = vmul.f32 %v2304, %v2306
    %v2308 = vadd.f32 %v2304, %v2307
    %vm2309 = vweird.f32 %v2301
    %vm2310 = vweird.f32 %v2304
    %vm2311 = vmor %vm2309, %vm2310
    %v2312 = vsel %vm2311, %v2304, %v2308
    %v2313 = vand.u32 2147483647, %v2301
    %vm2314 = vcmp.eq.f32.partialorder %v2313, 8.507059e+37
    %v2315 = vand.u32 %v2301, 2147483648
    %v2316 = vor.u32 1.1754944e-38, %v2315
    %v2317 = vsel %vm2314, %v2316, %v2312
    %v2318 = vmul.f32 1.0, %v2317
    %v2319 = vrcp.pop %v2302
    %v2320 = vmul.f32 %v2302, %v2319
    %v2321 = vsub.f32 1.0, %v2320
    %v2322 = vmul.f32 %v2319, %v2321
    %v2323 = vadd.f32 %v2319, %v2322
    %vm2324 = vweird.f32 %v2302
    %vm2325 = vweird.f32 %v2319
    %vm2326 = vmor %vm2324, %vm2325
    %v2327 = vsel %vm2326, %v2319, %v2323
    %v2328 = vand.u32 2147483647, %v2302
    %vm2329 = vcmp.eq.f32.partialorder %v2328, 8.507059e+37
    %v2330 = vand.u32 %v2302, 2147483648
    %v2331 = vor.u32 1.1754944e-38, %v2330
    %v2332 = vsel %vm2329, %v2331, %v2327
    %v2333 = vmul.f32 1.0, %v2332
    %v2334 = vrcp.pop %v2303
    %v2335 = vmul.f32 %v2303, %v2334
    %v2336 = vsub.f32 1.0, %v2335
    %v2337 = vmul.f32 %v2334, %v2336
    %v2338 = vadd.f32 %v2334, %v2337
    %vm2339 = vweird.f32 %v2303
    %vm2340 = vweird.f32 %v2334
    %vm2341 = vmor %vm2339, %vm2340
    %v2342 = vsel %vm2341, %v2334, %v2338
    %v2343 = vand.u32 2147483647, %v2303
    %vm2344 = vcmp.eq.f32.partialorder %v2343, 8.507059e+37
    %v2345 = vand.u32 %v2303, 2147483648
    %v2346 = vor.u32 1.1754944e-38, %v2345
    %v2347 = vsel %vm2344, %v2346, %v2342
    %v2348 = vmul.f32 1.0, %v2347
    %v2349 = vtanh.pop %v2291
    %v2351 = vrot.slane %v2190, 7
    %v2353 = vmul.f32 %v2333, %v2351
    %v2354 = vmul.f32 %v2318, %v2349
    %v2355 = vadd.f32 %v2353, %v2354
    %v2356 = vtanh.pop %v2355
    %v2357 = vmul.f32 %v2348, %v2356
    %v2358 = vsel %vm1694, %v1865, %v2027
    %v2359 = vsel %vm1696, %v2358, %v2192
    %v2360 = vsel %vm1698, %v2359, %v2357
    %2361 = vst [vmem:[#allocation12 + $0x8] sm:$0xf] %v2360
    %v2363 = vrot.slane %v2357, 3
    %v2366 = vrot.slane %v2355, 2
    %v2368 = vsel %vm1694, %v2363, %v2366
    %2369 = vst [vmem:[#allocation13] sm:$0x3] %v2368
    // Predicated region
    $region38: #{tpu_custom_call.1} parent=1 // pred_check
      _
    $region39: #{tpu_custom_call.1} parent=1 // pred_check_branch
      %2371 = sbr.rel (0) target = $region41
    $region40: #{tpu_custom_call.1} parent=1 // pred_region
      %2373 = vsyncadd [#allocation9], 0
      %s2374 = sshll.u32 [#allocation12], 4
      %s2375 = int_to_ptr.vmem [resolvable:$true] %s2374
      %s2376 = sshll.u32 %s7, 4
      %s2377 = int_to_ptr.hbm [resolvable:$true] %s2376
      %2382 = dma.vmem_to_hbm [thread:$0]  %s2375, 256, %s2377, [#allocation9], 128, 128, 8
    $region41: #{tpu_custom_call.1} parent=1 // pred_fallthru
      _
    // Predicated region
    $region42: #{tpu_custom_call.1} parent=1 // pred_check
      _
    $region43: #{tpu_custom_call.1} parent=1 // pred_check_branch
      %2384 = sbr.rel (0) target = $region45
    $region44: #{tpu_custom_call.1} parent=1 // pred_region
      %2386 = vsyncadd [#allocation14], 0
      %s2388 = sshll.u32 [#allocation13], 4
      %s2389 = int_to_ptr.vmem [resolvable:$true] %s2388
      %s2390 = sshll.u32 %s8, 4
      %s2391 = int_to_ptr.hbm [resolvable:$true] %s2390
      %2393 = dma.vmem_to_hbm [thread:$0]  %s2389, 32, %s2391, [#allocation14]
    $region45: #{tpu_custom_call.1} parent=1 // pred_fallthru
      _
    // Predicated region
    $region46: #{tpu_custom_call.1} parent=1 // pred_check
      _
    $region47: #{tpu_custom_call.1} parent=1 // pred_check_branch
      %2395 = sbr.rel (0) target = $region49
    $region48: #{tpu_custom_call.1} parent=1 // pred_region
      %2397 = dma.done [#allocation9], 256
    $region49: #{tpu_custom_call.1} parent=1 // pred_fallthru
      _
    // Predicated region
    $region50: #{tpu_custom_call.1} parent=1 // pred_check
      _
    $region51: #{tpu_custom_call.1} parent=1 // pred_check_branch
      %2399 = sbr.rel (0) target = $region53
    $region52: #{tpu_custom_call.1} parent=1 // pred_region
      %2401 = dma.done [#allocation14], 32
    $region53: #{tpu_custom_call.1} parent=1 // pred_fallthru
      _
    %2402 = vsyncpa [#allocation8], 1
    %2403 = vsyncpa [#allocation11], 1
    %2404 = vsyncpa [#allocation9], 1
    %2405 = vsyncpa [#allocation14], 1
  %2406 = vsyncmov [#allocation6]
  %s2407 = vpop.sfrf %2406
  %p2408 = scmp.eq.s32.totalorder %s2407, 0
  %p2409 = pneg %p2408
  %2411 = shalt.err (%p2409)
  %s2412 = scalar_lea.sflag [#allocation6], 1
  %2413 = vsyncmov %s2412
  %s2414 = vpop.sfrf %2413
  %p2415 = scmp.eq.s32.totalorder %s2414, 0
  %p2416 = pneg %p2415
  %2418 = shalt.err (%p2416)
  %s2419 = scalar_lea.sflag [#allocation6], 2
  %2420 = vsyncmov %s2419
  %s2421 = vpop.sfrf %2420
  %p2422 = scmp.eq.s32.totalorder %s2421, 0
  %p2423 = pneg %p2422
  %2425 = shalt.err (%p2423)

</llo_original>
